<compile_context>
chip_gen: v5e
topology: v5e:2x2
jax: 0.10.0
libtpu: 0.0.40
codegen_flags: <defaults>
</compile_context>

<pallas_src>
import functools

import jax
import jax.numpy as jnp
from jax.experimental import pallas as pl
from jax.experimental.pallas import tpu as pltpu

# Scaled-down resnet 'convert' config (structure preserved, channels reduced
# so the synthetic example stays small).  Original:
#   [[64, 256, 512, 1024, 2048], [128, 256, 512, 512, 512]]
CONVERT_CFG = [[16, 32, 64, 128, 256], [32, 64, 128, 128, 128]]
_POOL_STRIDES = [2, 4, 8, 8, 8]      # synthetic backbone pyramid strides
_FUSE_CH = 64                        # merge2 stand-in fuse width
_SCORE_LANES = 128                   # lane-dense score slab width
_COMPUTE_DTYPE = jnp.bfloat16        # MXU input / output-slab dtype
_SUBLANE = 16                        # bf16-safe row alignment


# ----------------------------- per-chip tuning ------------------------------

def _tpu_defaults():
    """(max row tile, vmem limit): bigger tiles where VMEM is 128 MiB
    (v5e/v6e), conservative where it is 64 MiB (v7x) or unknown."""
    try:
        kind = jax.devices()[0].device_kind.lower()
    except Exception:
        kind = ""
    if ("v5e" in kind or "v5 lite" in kind or "v5litepod" in kind
            or "v6" in kind):
        return 2048, 64 * 1024 * 1024
    return 1024, 32 * 1024 * 1024


_MAX_ROW_TILE, _VMEM_LIMIT = _tpu_defaults()

_COMPILER_PARAMS = pltpu.CompilerParams(
    dimension_semantics=("parallel",),
    vmem_limit_bytes=_VMEM_LIMIT,
)


# ----------------------------- tiling helpers ------------------------------

def _row_tile(m):
    """Pick (tile, padded_rows): tile divides padded_rows exactly (no dead
    padded tile), is sublane-aligned, caps at _MAX_ROW_TILE, and keeps
    grid >= 2 whenever possible so the parallel M axis shards across both
    v7x TensorCores."""
    m_pad = -(-m // _SUBLANE) * _SUBLANE
    cap = min(_MAX_ROW_TILE, m_pad // 2)
    best = None
    t = _SUBLANE
    while t <= cap:
        if m_pad % t == 0:
            best = t
        t += _SUBLANE
    if best is None:            # tiny level: single full tile
        return m_pad, m_pad
    return best, m_pad


def _pad_rows(x2d, m_pad):
    m = x2d.shape[0]
    if m_pad == m:
        return x2d
    return jnp.pad(x2d, ((0, m_pad - m), (0, 0)))


# ------------------------------ Pallas kernels ------------------------------

def _level_kernel(x_ref, w0_ref, w1_ref, ws_ref, *out_refs, cin0, feat_slice):
    """Fused per-level chain: base 1x1 proj (+ReLU) -> convert 1x1 (+ReLU)
    -> lane-dense score slab.  When several equal-resolution levels are
    batched into this call, w1 is block-diagonal and the per-level score
    heads occupy distinct lanes of ws.  Only the (optional) feature slice
    that is consumed downstream is written back."""
    if feat_slice is None:
        (score_ref,) = out_refs
        feat_ref = None
    else:
        feat_ref, score_ref = out_refs

    x = x_ref[...].astype(jnp.float32)              # (tm, cin0), cin0 == 3
    w0 = w0_ref[...].astype(jnp.float32)            # (cin0, c0)
    # cin0 is tiny: unrolled VPU multiply-adds (cheap, MXU/VPU are idle in
    # this HBM-write-bound regime).
    h0 = x[:, 0:1] * w0[0:1, :]
    for k in range(1, cin0):
        h0 = h0 + x[:, k:k + 1] * w0[k:k + 1, :]
    h0 = jnp.maximum(h0, 0.0).astype(_COMPUTE_DTYPE)

    # Faithful ConvertLayer hot path: 1x1 conv (no bias) + ReLU on the MXU
    # (block-diagonal weight when several levels are batched).
    h1 = jnp.dot(h0, w1_ref[...], preferred_element_type=jnp.float32)
    h1 = jnp.maximum(h1, 0.0).astype(_COMPUTE_DTYPE)   # single bf16 cast, reused

    if feat_ref is not None:
        lo, hi = feat_slice
        feat_ref[...] = h1[:, lo:hi]

    score = jnp.dot(h1, ws_ref[...], preferred_element_type=jnp.float32)
    score_ref[...] = score.astype(score_ref.dtype)


def _fuse_kernel(e_ref, s_ref, wfe_ref, wfs_ref, ws_ref, o_ref):
    """merge2 stand-in: split-weight fuse (avoids an HBM concat) + ReLU
    + lane-dense final score head, all in one kernel, bf16 in/out."""
    h = jnp.dot(e_ref[...], wfe_ref[...], preferred_element_type=jnp.float32)
    h = h + jnp.dot(s_ref[...], wfs_ref[...], preferred_element_type=jnp.float32)
    h = jnp.maximum(h, 0.0).astype(_COMPUTE_DTYPE)
    o_ref[...] = jnp.dot(h, ws_ref[...],
                         preferred_element_type=jnp.float32).astype(o_ref.dtype)


# ------------------------------ kernel wrappers -----------------------------

def fused_level(x2d, w0, w1, ws, *, feat_slice=None):
    """x2d: (M, cin0) rows.  w0: (cin0, c0), w1: (c0, c1), ws: (c1, 128).
    Returns (feature (M, hi-lo) bf16 or None, score slab (M, 128) bf16)."""
    m, cin0 = x2d.shape
    c0 = w0.shape[1]
    c1 = w1.shape[1]
    tm, m_pad = _row_tile(m)
    x2d = _pad_rows(x2d.astype(jnp.float32), m_pad)

    score_shape = jax.ShapeDtypeStruct((m_pad, _SCORE_LANES), _COMPUTE_DTYPE)
    score_spec = pl.BlockSpec((tm, _SCORE_LANES), lambda i: (i, 0))
    if feat_slice is None:
        out_shape = score_shape
        out_specs = score_spec
    else:
        fw = feat_slice[1] - feat_slice[0]
        out_shape = (jax.ShapeDtypeStruct((m_pad, fw), _COMPUTE_DTYPE),
                     score_shape)
        out_specs = [pl.BlockSpec((tm, fw), lambda i: (i, 0)), score_spec]

    res = pl.pallas_call(
        functools.partial(_level_kernel, cin0=cin0, feat_slice=feat_slice),
        out_shape=out_shape,
        grid_spec=pltpu.PrefetchScalarGridSpec(
            num_scalar_prefetch=0,
            grid=(m_pad // tm,),
            in_specs=[
                pl.BlockSpec((tm, cin0), lambda i: (i, 0)),          # rows
                pl.BlockSpec((cin0, c0), lambda i: (0, 0)),          # resident W0
                pl.BlockSpec((c0, c1), lambda i: (0, 0)),            # resident W1
                pl.BlockSpec((c1, _SCORE_LANES), lambda i: (0, 0)),  # score heads
            ],
            out_specs=out_specs,
        ),
        compiler_params=_COMPILER_PARAMS,
    )(x2d, w0, w1, ws)

    if feat_slice is None:
        return None, res[:m]
    feat, score = res
    return feat[:m], score[:m]


def fused_merge2(edge2d, sal2d, wfe, wfs, ws):
    """edge2d: (M, ce) bf16, sal2d: (M, cs) bf16; returns (M, 1) final score."""
    m, ce = edge2d.shape
    cs = sal2d.shape[1]
    cf = wfe.shape[1]
    tm, m_pad = _row_tile(m)
    edge2d = _pad_rows(edge2d.astype(_COMPUTE_DTYPE), m_pad)   # no-op if bf16
    sal2d = _pad_rows(sal2d.astype(_COMPUTE_DTYPE), m_pad)

    score = pl.pallas_call(
        _fuse_kernel,
        out_shape=jax.ShapeDtypeStruct((m_pad, _SCORE_LANES), _COMPUTE_DTYPE),
        grid_spec=pltpu.PrefetchScalarGridSpec(
            num_scalar_prefetch=0,
            grid=(m_pad // tm,),
            in_specs=[
                pl.BlockSpec((tm, ce), lambda i: (i, 0)),
                pl.BlockSpec((tm, cs), lambda i: (i, 0)),
                pl.BlockSpec((ce, cf), lambda i: (0, 0)),
                pl.BlockSpec((cs, cf), lambda i: (0, 0)),
                pl.BlockSpec((cf, _SCORE_LANES), lambda i: (0, 0)),
            ],
            out_specs=pl.BlockSpec((tm, _SCORE_LANES), lambda i: (i, 0)),
        ),
        compiler_params=_COMPILER_PARAMS,
    )(edge2d, sal2d, wfe, wfs, ws)
    return score[:m, 0:1]


# ------------------------------ glue (JAX) ----------------------------------

def _avg_pool2_nhwc(x):
    """Stride-2 average pool (H, W assumed even)."""
    n, h, w, c = x.shape
    return x.reshape(n, h // 2, 2, w // 2, 2, c).mean(axis=(2, 4))


def _score_to_nchw(score_rows, n, h, w, x_size):
    """(M, 1) score rows -> bilinear-resized (N, 1, H, W) f32."""
    s = score_rows.astype(jnp.float32).reshape(n, h, w, 1)
    s = jax.image.resize(s, (n, x_size[0], x_size[1], 1), method="bilinear")
    return jnp.transpose(s, (0, 3, 1, 2))


def _prep_weights(params):
    """Kernel-ready weights: (in, out) layout, bf16 MXU operands, score heads
    packed into lane-dense 128-wide slabs (per-level lanes when batched)."""
    c0 = CONVERT_CFG[0]
    c1 = CONVERT_CFG[1]

    def head_to_slab(head_oi, rows, lane=0, row_off=0):
        slab = jnp.zeros((rows, _SCORE_LANES), jnp.float32)
        return slab.at[row_off:row_off + head_oi.shape[1], lane].set(head_oi[0])

    w = {}
    # level 0 (edge) and level 1: per-level weights.
    w["w0_0"] = jnp.transpose(params["base"][0]).astype(jnp.float32)
    w["w1_0"] = jnp.transpose(params["convert"][0]).astype(_COMPUTE_DTYPE)
    w["ws_0"] = head_to_slab(params["edge_score"], c1[0]).astype(_COMPUTE_DTYPE)

    w["w0_1"] = jnp.transpose(params["base"][1]).astype(jnp.float32)
    w["w1_1"] = jnp.transpose(params["convert"][1]).astype(_COMPUTE_DTYPE)
    w["ws_1"] = head_to_slab(params["sal_score"][0], c1[1]).astype(_COMPUTE_DTYPE)

    # levels 2..4 share one resolution -> one batched kernel:
    #   * 3->c0 projections concatenated along output channels,
    #   * ConvertLayer weights block-diagonal,
    #   * per-level score heads in lanes 0..2 of one 128-lane slab.
    w["w0_b"] = jnp.concatenate(
        [jnp.transpose(params["base"][l]) for l in (2, 3, 4)],
        axis=1).astype(jnp.float32)
    cin_tot = sum(c0[2:])
    cout_tot = sum(c1[2:])
    w1_b = jnp.zeros((cin_tot, cout_tot), jnp.float32)
    ws_b = jnp.zeros((cout_tot, _SCORE_LANES), jnp.float32)
    ri, co = 0, 0
    for lane, l in enumerate((2, 3, 4)):
        w1_b = w1_b.at[ri:ri + c0[l], co:co + c1[l]].set(
            jnp.transpose(params["convert"][l]))
        ws_b = ws_b.at[co:co + c1[l], lane].set(params["sal_score"][l - 1][0])
        ri += c0[l]
        co += c1[l]
    w["w1_b"] = w1_b.astype(_COMPUTE_DTYPE)
    w["ws_b"] = ws_b.astype(_COMPUTE_DTYPE)
    w["feat_slice_b"] = (cout_tot - c1[4], cout_tot)   # deepest-level feature

    # merge2 stand-in: split fuse weight + lane-dense final head.
    fuse = jnp.transpose(params["fuse"])               # (c1_0 + c1_4, fuse_ch)
    w["wfe"] = fuse[:c1[0]].astype(_COMPUTE_DTYPE)
    w["wfs"] = fuse[c1[0]:].astype(_COMPUTE_DTYPE)
    w["wfinal"] = head_to_slab(params["final_score"],
                               _FUSE_CH).astype(_COMPUTE_DTYPE)
    return w


def init_params(key):
    keys = iter(jax.random.split(key, 32))
    params = {}
    # synthetic base: per-level channel projection 3 -> CONVERT_CFG[0][i]
    params["base"] = [
        jax.random.normal(next(keys), (co, 3), jnp.float32) * 0.1
        for co in CONVERT_CFG[0]]
    # ConvertLayer: 1x1 conv, no bias (faithful to reference ConvertLayer)
    params["convert"] = [
        jax.random.normal(next(keys), (co, ci), jnp.float32) * (1.0 / ci) ** 0.5
        for ci, co in zip(CONVERT_CFG[0], CONVERT_CFG[1])]
    # merge1 stand-in heads
    params["edge_score"] = (
        jax.random.normal(next(keys), (1, CONVERT_CFG[1][0]), jnp.float32) * 0.1)
    params["sal_score"] = [
        jax.random.normal(next(keys), (1, co), jnp.float32) * 0.1
        for co in CONVERT_CFG[1][1:]]
    # merge2 stand-in: fuse edge + sal feature, then final score
    fuse_cin = CONVERT_CFG[1][0] + CONVERT_CFG[1][-1]
    params["fuse"] = (
        jax.random.normal(next(keys), (_FUSE_CH, fuse_cin), jnp.float32)
        * (1.0 / fuse_cin) ** 0.5)
    params["final_score"] = (
        jax.random.normal(next(keys), (1, _FUSE_CH), jnp.float32) * 0.1)
    return params


def tun_bone_forward(x, params, base_model_cfg="resnet"):
    if base_model_cfg != "resnet":
        raise NotImplementedError("only the resnet path is implemented")

    n, c, hh, ww = x.shape
    x_size = (hh, ww)
    # NCHW -> NHWC exactly once; everything below runs on channel-last rows.
    x_nhwc = jnp.transpose(x, (0, 2, 3, 1))

    w = _prep_weights(params)

    # TODO(synk): `base`, `merge1_layers`, `merge2_layers` are externally
    # supplied modules in the reference (undefined in the snippet); base =
    # hierarchical avg-pool pyramid + 1x1 projection (fused into the level
    # kernels), merge1/merge2 = minimal score-head stand-ins preserving the
    # (up_edge, up_sal, up_sal_final) interface.
    pool2 = _avg_pool2_nhwc(x_nhwc)        # stride 2  (level 0)
    pool4 = _avg_pool2_nhwc(pool2)         # stride 4  (level 1)
    pool8 = _avg_pool2_nhwc(pool4)         # stride 8  (levels 2,3,4)

    h0_, w0_ = pool2.shape[1], pool2.shape[2]
    h1_, w1_ = pool4.shape[1], pool4.shape[2]
    h8_, w8_ = pool8.shape[1], pool8.shape[2]

    # level 0: edge level (feature feeds merge2, score -> up_edge)
    feat0, score0 = fused_level(pool2.reshape(-1, c), w["w0_0"], w["w1_0"],
                                w["ws_0"], feat_slice=(0, CONVERT_CFG[1][0]))
    # level 1: only its score is consumed downstream -> no feature writeback
    _, score1 = fused_level(pool4.reshape(-1, c), w["w0_1"], w["w1_1"],
                            w["ws_1"])
    # levels 2..4 batched: one call, scores in lanes 0..2, deepest feature only
    feat4, score_b = fused_level(pool8.reshape(-1, c), w["w0_b"], w["w1_b"],
                                 w["ws_b"], feat_slice=w["feat_slice_b"])

    # merge1 stand-in: edge head from level 0, sal heads from levels 1..4.
    up_edge = [_score_to_nchw(score0[:, 0:1], n, h0_, w0_, x_size)]
    up_sal = [_score_to_nchw(score1[:, 0:1], n, h1_, w1_, x_size)]
    up_sal += [_score_to_nchw(score_b[:, l:l + 1], n, h8_, w8_, x_size)
               for l in range(3)]

    # merge2 stand-in: fuse edge feature with upsampled deepest sal feature
    # (kept bf16 end-to-end; the (n, he, we, c1) resize never upcasts to f32).
    c1_last = CONVERT_CFG[1][-1]
    sal_map = feat4.reshape(n, h8_, w8_, c1_last)
    sal_up = jax.image.resize(sal_map, (n, h0_, w0_, c1_last), method="bilinear")
    final_rows = fused_merge2(feat0, sal_up.reshape(-1, c1_last),
                              w["wfe"], w["wfs"], w["wfinal"])
    up_sal_final = [_score_to_nchw(final_rows, n, h0_, w0_, x_size)]

    return up_edge, up_sal, up_sal_final


# --------------------------------- main -------------------------------------

if __name__ == "__main__":
    x = jax.random.normal(jax.random.PRNGKey(0), (2, 3, 16, 16), jnp.float32)
    params = init_params(jax.random.PRNGKey(42))

    forward = jax.jit(functools.partial(tun_bone_forward,
                                        base_model_cfg="resnet"))
    up_edge, up_sal, up_sal_final = forward(x, params)
    jax.block_until_ready((up_edge, up_sal, up_sal_final))

    assert up_edge[0].shape == (2, 1, 16, 16)
    assert len(up_sal) == 4 and all(s.shape == (2, 1, 16, 16) for s in up_sal)
    assert up_sal_final[0].shape == (2, 1, 16, 16)
    assert all(bool(jnp.all(jnp.isfinite(t)))
               for t in up_edge + up_sal + up_sal_final)
    print("KERNEL_OK")
</pallas_src>

<mosaic_0001>
module attributes {stable_mosaic.version = 11 : i64} {
  func.func @_level_kernel(%arg0: i32, %arg1: memref<16x3xf32, #tpu.memory_space<vmem>>, %arg2: memref<3x448xf32, #tpu.memory_space<vmem>>, %arg3: memref<448x384xbf16, #tpu.memory_space<vmem>>, %arg4: memref<384x128xbf16, #tpu.memory_space<vmem>>, %arg5: memref<16x128xbf16, #tpu.memory_space<vmem>>, %arg6: memref<16x128xbf16, #tpu.memory_space<vmem>>) attributes {dimension_semantics = [#tpu.dimension_semantics<parallel>], iteration_bounds = array<i64: 1>, scalar_prefetch = 0 : i64, scratch_operands = 0 : i64, tpu.core_type = #tpu.core_type<tc>, window_params = [{transform_indices = @transform_0, window_bounds = array<i64: 16, 3>}, {pipeline_mode = #tpu.pipeline_mode<synchronous>, transform_indices = @transform_1, window_bounds = array<i64: 3, 448>}, {pipeline_mode = #tpu.pipeline_mode<synchronous>, transform_indices = @transform_2, window_bounds = array<i64: 448, 384>}, {pipeline_mode = #tpu.pipeline_mode<synchronous>, transform_indices = @transform_3, window_bounds = array<i64: 384, 128>}, {transform_indices = @transform_4, window_bounds = array<i64: 16, 128>}, {transform_indices = @transform_5, window_bounds = array<i64: 16, 128>}]} {
    %c0 = arith.constant 0 : index
    %c0_0 = arith.constant 0 : index
    %0 = vector.load %arg1[%c0, %c0_0] : memref<16x3xf32, #tpu.memory_space<vmem>>, vector<16x3xf32>
    %c0_1 = arith.constant 0 : index
    %c0_2 = arith.constant 0 : index
    %1 = vector.load %arg2[%c0_1, %c0_2] : memref<3x448xf32, #tpu.memory_space<vmem>>, vector<3x448xf32>
    %2 = vector.extract_strided_slice %0 {offsets = [0, 0], sizes = [16, 1], strides = [1, 1]} : vector<16x3xf32> to vector<16x1xf32>
    %3 = vector.extract_strided_slice %1 {offsets = [0, 0], sizes = [1, 448], strides = [1, 1]} : vector<3x448xf32> to vector<1x448xf32>
    %4 = vector.broadcast %2 : vector<16x1xf32> to vector<16x448xf32>
    %5 = vector.broadcast %3 : vector<1x448xf32> to vector<16x448xf32>
    %6 = arith.mulf %4, %5 : vector<16x448xf32>
    %7 = vector.extract_strided_slice %0 {offsets = [0, 1], sizes = [16, 1], strides = [1, 1]} : vector<16x3xf32> to vector<16x1xf32>
    %8 = vector.extract_strided_slice %1 {offsets = [1, 0], sizes = [1, 448], strides = [1, 1]} : vector<3x448xf32> to vector<1x448xf32>
    %9 = vector.broadcast %7 : vector<16x1xf32> to vector<16x448xf32>
    %10 = vector.broadcast %8 : vector<1x448xf32> to vector<16x448xf32>
    %11 = arith.mulf %9, %10 : vector<16x448xf32>
    %12 = arith.addf %6, %11 : vector<16x448xf32>
    %13 = vector.extract_strided_slice %0 {offsets = [0, 2], sizes = [16, 1], strides = [1, 1]} : vector<16x3xf32> to vector<16x1xf32>
    %14 = vector.extract_strided_slice %1 {offsets = [2, 0], sizes = [1, 448], strides = [1, 1]} : vector<3x448xf32> to vector<1x448xf32>
    %15 = vector.broadcast %13 : vector<16x1xf32> to vector<16x448xf32>
    %16 = vector.broadcast %14 : vector<1x448xf32> to vector<16x448xf32>
    %17 = arith.mulf %15, %16 : vector<16x448xf32>
    %18 = arith.addf %12, %17 : vector<16x448xf32>
    %cst = arith.constant 0.000000e+00 : f32
    %19 = vector.broadcast %cst : f32 to vector<16x448xf32>
    %20 = arith.maximumf %18, %19 : vector<16x448xf32>
    %21 = arith.truncf %20 : vector<16x448xf32> to vector<16x448xbf16>
    %c0_3 = arith.constant 0 : index
    %c0_4 = arith.constant 0 : index
    %22 = vector.load %arg3[%c0_3, %c0_4] : memref<448x384xbf16, #tpu.memory_space<vmem>>, vector<448x384xbf16>
    %cst_5 = arith.constant dense<0.000000e+00> : vector<16x384xf32>
    %23 = tpu.matmul %21, %22, %cst_5 {dimension_numbers = #tpu.dot_dimension_numbers<[1], [0], [0], [1], [0, 0, 1, 1], [], []>} : vector<16x448xbf16>, vector<448x384xbf16>, vector<16x384xf32> -> vector<16x384xf32>
    %cst_6 = arith.constant 0.000000e+00 : f32
    %24 = vector.broadcast %cst_6 : f32 to vector<16x384xf32>
    %25 = arith.maximumf %23, %24 : vector<16x384xf32>
    %26 = arith.truncf %25 : vector<16x384xf32> to vector<16x384xbf16>
    %27 = vector.extract_strided_slice %26 {offsets = [0, 256], sizes = [16, 128], strides = [1, 1]} : vector<16x384xbf16> to vector<16x128xbf16>
    %c0_7 = arith.constant 0 : index
    %c0_8 = arith.constant 0 : index
    %28 = vector.load %arg5[%c0_7, %c0_8] : memref<16x128xbf16, #tpu.memory_space<vmem>>, vector<16x128xbf16>
    tpu.vector_store %arg5[%c0_7, %c0_8], %27 {strides = array<i32>} : memref<16x128xbf16, #tpu.memory_space<vmem>>, vector<16x128xbf16>,
    %c0_9 = arith.constant 0 : index
    %c0_10 = arith.constant 0 : index
    %29 = vector.load %arg4[%c0_9, %c0_10] : memref<384x128xbf16, #tpu.memory_space<vmem>>, vector<384x128xbf16>
    %cst_11 = arith.constant dense<0.000000e+00> : vector<16x128xf32>
    %30 = tpu.matmul %26, %29, %cst_11 {dimension_numbers = #tpu.dot_dimension_numbers<[1], [0], [0], [1], [0, 0, 1, 1], [], []>} : vector<16x384xbf16>, vector<384x128xbf16>, vector<16x128xf32> -> vector<16x128xf32>
    %31 = arith.truncf %30 : vector<16x128xf32> to vector<16x128xbf16>
    %c0_12 = arith.constant 0 : index
    %c0_13 = arith.constant 0 : index
    %32 = vector.load %arg6[%c0_12, %c0_13] : memref<16x128xbf16, #tpu.memory_space<vmem>>, vector<16x128xbf16>
    tpu.vector_store %arg6[%c0_12, %c0_13], %31 {strides = array<i32>} : memref<16x128xbf16, #tpu.memory_space<vmem>>, vector<16x128xbf16>,
    return
  }
  func.func @transform_0(%arg0: i32) -> (i32, i32) {
    %c0_i32 = arith.constant 0 : i32
    %c0_i32_0 = arith.constant 0 : i32
    return %arg0, %c0_i32 : i32, i32
  }
  func.func @transform_1(%arg0: i32) -> (i32, i32) {
    %c0_i32 = arith.constant 0 : i32
    %c0_i32_0 = arith.constant 0 : i32
    %c0_i32_1 = arith.constant 0 : i32
    return %c0_i32, %c0_i32_0 : i32, i32
  }
  func.func @transform_2(%arg0: i32) -> (i32, i32) {
    %c0_i32 = arith.constant 0 : i32
    %c0_i32_0 = arith.constant 0 : i32
    %c0_i32_1 = arith.constant 0 : i32
    return %c0_i32, %c0_i32_0 : i32, i32
  }
  func.func @transform_3(%arg0: i32) -> (i32, i32) {
    %c0_i32 = arith.constant 0 : i32
    %c0_i32_0 = arith.constant 0 : i32
    %c0_i32_1 = arith.constant 0 : i32
    return %c0_i32, %c0_i32_0 : i32, i32
  }
  func.func @transform_4(%arg0: i32) -> (i32, i32) {
    %c0_i32 = arith.constant 0 : i32
    %c0_i32_0 = arith.constant 0 : i32
    return %arg0, %c0_i32 : i32, i32
  }
  func.func @transform_5(%arg0: i32) -> (i32, i32) {
    %c0_i32 = arith.constant 0 : i32
    %c0_i32_0 = arith.constant 0 : i32
    return %arg0, %c0_i32 : i32, i32
  }
}

module attributes {stable_mosaic.version = 11 : i64} {
  func.func @_level_kernel(%arg0: i32, %arg1: memref<64x3xf32, #tpu.memory_space<vmem>>, %arg2: memref<3x16xf32, #tpu.memory_space<vmem>>, %arg3: memref<16x32xbf16, #tpu.memory_space<vmem>>, %arg4: memref<32x128xbf16, #tpu.memory_space<vmem>>, %arg5: memref<64x32xbf16, #tpu.memory_space<vmem>>, %arg6: memref<64x128xbf16, #tpu.memory_space<vmem>>) attributes {dimension_semantics = [#tpu.dimension_semantics<parallel>], iteration_bounds = array<i64: 2>, scalar_prefetch = 0 : i64, scratch_operands = 0 : i64, tpu.core_type = #tpu.core_type<tc>, window_params = [{transform_indices = @transform_0, window_bounds = array<i64: 64, 3>}, {pipeline_mode = #tpu.pipeline_mode<synchronous>, transform_indices = @transform_1, window_bounds = array<i64: 3, 16>}, {pipeline_mode = #tpu.pipeline_mode<synchronous>, transform_indices = @transform_2, window_bounds = array<i64: 16, 32>}, {pipeline_mode = #tpu.pipeline_mode<synchronous>, transform_indices = @transform_3, window_bounds = array<i64: 32, 128>}, {transform_indices = @transform_4, window_bounds = array<i64: 64, 32>}, {transform_indices = @transform_5, window_bounds = array<i64: 64, 128>}]} {
    %c0 = arith.constant 0 : index
    %c0_0 = arith.constant 0 : index
    %0 = vector.load %arg1[%c0, %c0_0] : memref<64x3xf32, #tpu.memory_space<vmem>>, vector<64x3xf32>
    %c0_1 = arith.constant 0 : index
    %c0_2 = arith.constant 0 : index
    %1 = vector.load %arg2[%c0_1, %c0_2] : memref<3x16xf32, #tpu.memory_space<vmem>>, vector<3x16xf32>
    %2 = vector.extract_strided_slice %0 {offsets = [0, 0], sizes = [64, 1], strides = [1, 1]} : vector<64x3xf32> to vector<64x1xf32>
    %3 = vector.extract_strided_slice %1 {offsets = [0, 0], sizes = [1, 16], strides = [1, 1]} : vector<3x16xf32> to vector<1x16xf32>
    %4 = vector.broadcast %2 : vector<64x1xf32> to vector<64x16xf32>
    %5 = vector.broadcast %3 : vector<1x16xf32> to vector<64x16xf32>
    %6 = arith.mulf %4, %5 : vector<64x16xf32>
    %7 = vector.extract_strided_slice %0 {offsets = [0, 1], sizes = [64, 1], strides = [1, 1]} : vector<64x3xf32> to vector<64x1xf32>
    %8 = vector.extract_strided_slice %1 {offsets = [1, 0], sizes = [1, 16], strides = [1, 1]} : vector<3x16xf32> to vector<1x16xf32>
    %9 = vector.broadcast %7 : vector<64x1xf32> to vector<64x16xf32>
    %10 = vector.broadcast %8 : vector<1x16xf32> to vector<64x16xf32>
    %11 = arith.mulf %9, %10 : vector<64x16xf32>
    %12 = arith.addf %6, %11 : vector<64x16xf32>
    %13 = vector.extract_strided_slice %0 {offsets = [0, 2], sizes = [64, 1], strides = [1, 1]} : vector<64x3xf32> to vector<64x1xf32>
    %14 = vector.extract_strided_slice %1 {offsets = [2, 0], sizes = [1, 16], strides = [1, 1]} : vector<3x16xf32> to vector<1x16xf32>
    %15 = vector.broadcast %13 : vector<64x1xf32> to vector<64x16xf32>
    %16 = vector.broadcast %14 : vector<1x16xf32> to vector<64x16xf32>
    %17 = arith.mulf %15, %16 : vector<64x16xf32>
    %18 = arith.addf %12, %17 : vector<64x16xf32>
    %cst = arith.constant 0.000000e+00 : f32
    %19 = vector.broadcast %cst : f32 to vector<64x16xf32>
    %20 = arith.maximumf %18, %19 : vector<64x16xf32>
    %21 = arith.truncf %20 : vector<64x16xf32> to vector<64x16xbf16>
    %c0_3 = arith.constant 0 : index
    %c0_4 = arith.constant 0 : index
    %22 = vector.load %arg3[%c0_3, %c0_4] : memref<16x32xbf16, #tpu.memory_space<vmem>>, vector<16x32xbf16>
    %cst_5 = arith.constant dense<0.000000e+00> : vector<64x32xf32>
    %23 = tpu.matmul %21, %22, %cst_5 {dimension_numbers = #tpu.dot_dimension_numbers<[1], [0], [0], [1], [0, 0, 1, 1], [], []>} : vector<64x16xbf16>, vector<16x32xbf16>, vector<64x32xf32> -> vector<64x32xf32>
    %cst_6 = arith.constant 0.000000e+00 : f32
    %24 = vector.broadcast %cst_6 : f32 to vector<64x32xf32>
    %25 = arith.maximumf %23, %24 : vector<64x32xf32>
    %26 = arith.truncf %25 : vector<64x32xf32> to vector<64x32xbf16>
    %c0_7 = arith.constant 0 : index
    %c0_8 = arith.constant 0 : index
    %27 = vector.load %arg5[%c0_7, %c0_8] : memref<64x32xbf16, #tpu.memory_space<vmem>>, vector<64x32xbf16>
    tpu.vector_store %arg5[%c0_7, %c0_8], %26 {strides = array<i32>} : memref<64x32xbf16, #tpu.memory_space<vmem>>, vector<64x32xbf16>,
    %c0_9 = arith.constant 0 : index
    %c0_10 = arith.constant 0 : index
    %28 = vector.load %arg4[%c0_9, %c0_10] : memref<32x128xbf16, #tpu.memory_space<vmem>>, vector<32x128xbf16>
    %cst_11 = arith.constant dense<0.000000e+00> : vector<64x128xf32>
    %29 = tpu.matmul %26, %28, %cst_11 {dimension_numbers = #tpu.dot_dimension_numbers<[1], [0], [0], [1], [0, 0, 1, 1], [], []>} : vector<64x32xbf16>, vector<32x128xbf16>, vector<64x128xf32> -> vector<64x128xf32>
    %30 = arith.truncf %29 : vector<64x128xf32> to vector<64x128xbf16>
    %c0_12 = arith.constant 0 : index
    %c0_13 = arith.constant 0 : index
    %31 = vector.load %arg6[%c0_12, %c0_13] : memref<64x128xbf16, #tpu.memory_space<vmem>>, vector<64x128xbf16>
    tpu.vector_store %arg6[%c0_12, %c0_13], %30 {strides = array<i32>} : memref<64x128xbf16, #tpu.memory_space<vmem>>, vector<64x128xbf16>,
    return
  }
  func.func @transform_0(%arg0: i32) -> (i32, i32) {
    %c0_i32 = arith.constant 0 : i32
    %c0_i32_0 = arith.constant 0 : i32
    return %arg0, %c0_i32 : i32, i32
  }
  func.func @transform_1(%arg0: i32) -> (i32, i32) {
    %c0_i32 = arith.constant 0 : i32
    %c0_i32_0 = arith.constant 0 : i32
    %c0_i32_1 = arith.constant 0 : i32
    return %c0_i32, %c0_i32_0 : i32, i32
  }
  func.func @transform_2(%arg0: i32) -> (i32, i32) {
    %c0_i32 = arith.constant 0 : i32
    %c0_i32_0 = arith.constant 0 : i32
    %c0_i32_1 = arith.constant 0 : i32
    return %c0_i32, %c0_i32_0 : i32, i32
  }
  func.func @transform_3(%arg0: i32) -> (i32, i32) {
    %c0_i32 = arith.constant 0 : i32
    %c0_i32_0 = arith.constant 0 : i32
    %c0_i32_1 = arith.constant 0 : i32
    return %c0_i32, %c0_i32_0 : i32, i32
  }
  func.func @transform_4(%arg0: i32) -> (i32, i32) {
    %c0_i32 = arith.constant 0 : i32
    %c0_i32_0 = arith.constant 0 : i32
    return %arg0, %c0_i32 : i32, i32
  }
  func.func @transform_5(%arg0: i32) -> (i32, i32) {
    %c0_i32 = arith.constant 0 : i32
    %c0_i32_0 = arith.constant 0 : i32
    return %arg0, %c0_i32 : i32, i32
  }
}

module attributes {stable_mosaic.version = 11 : i64} {
  func.func @_fuse_kernel(%arg0: i32, %arg1: memref<64x32xbf16, #tpu.memory_space<vmem>>, %arg2: memref<64x128xbf16, #tpu.memory_space<vmem>>, %arg3: memref<32x64xbf16, #tpu.memory_space<vmem>>, %arg4: memref<128x64xbf16, #tpu.memory_space<vmem>>, %arg5: memref<64x128xbf16, #tpu.memory_space<vmem>>, %arg6: memref<64x128xbf16, #tpu.memory_space<vmem>>) attributes {dimension_semantics = [#tpu.dimension_semantics<parallel>], iteration_bounds = array<i64: 2>, scalar_prefetch = 0 : i64, scratch_operands = 0 : i64, tpu.core_type = #tpu.core_type<tc>, window_params = [{transform_indices = @transform_0, window_bounds = array<i64: 64, 32>}, {transform_indices = @transform_1, window_bounds = array<i64: 64, 128>}, {pipeline_mode = #tpu.pipeline_mode<synchronous>, transform_indices = @transform_2, window_bounds = array<i64: 32, 64>}, {pipeline_mode = #tpu.pipeline_mode<synchronous>, transform_indices = @transform_3, window_bounds = array<i64: 128, 64>}, {pipeline_mode = #tpu.pipeline_mode<synchronous>, transform_indices = @transform_4, window_bounds = array<i64: 64, 128>}, {transform_indices = @transform_5, window_bounds = array<i64: 64, 128>}]} {
    %c0 = arith.constant 0 : index
    %c0_0 = arith.constant 0 : index
    %0 = vector.load %arg1[%c0, %c0_0] : memref<64x32xbf16, #tpu.memory_space<vmem>>, vector<64x32xbf16>
    %c0_1 = arith.constant 0 : index
    %c0_2 = arith.constant 0 : index
    %1 = vector.load %arg3[%c0_1, %c0_2] : memref<32x64xbf16, #tpu.memory_space<vmem>>, vector<32x64xbf16>
    %cst = arith.constant dense<0.000000e+00> : vector<64x64xf32>
    %2 = tpu.matmul %0, %1, %cst {dimension_numbers = #tpu.dot_dimension_numbers<[1], [0], [0], [1], [0, 0, 1, 1], [], []>} : vector<64x32xbf16>, vector<32x64xbf16>, vector<64x64xf32> -> vector<64x64xf32>
    %c0_3 = arith.constant 0 : index
    %c0_4 = arith.constant 0 : index
    %3 = vector.load %arg2[%c0_3, %c0_4] : memref<64x128xbf16, #tpu.memory_space<vmem>>, vector<64x128xbf16>
    %c0_5 = arith.constant 0 : index
    %c0_6 = arith.constant 0 : index
    %4 = vector.load %arg4[%c0_5, %c0_6] : memref<128x64xbf16, #tpu.memory_space<vmem>>, vector<128x64xbf16>
    %cst_7 = arith.constant dense<0.000000e+00> : vector<64x64xf32>
    %5 = tpu.matmul %3, %4, %cst_7 {dimension_numbers = #tpu.dot_dimension_numbers<[1], [0], [0], [1], [0, 0, 1, 1], [], []>} : vector<64x128xbf16>, vector<128x64xbf16>, vector<64x64xf32> -> vector<64x64xf32>
    %6 = arith.addf %2, %5 : vector<64x64xf32>
    %cst_8 = arith.constant 0.000000e+00 : f32
    %7 = vector.broadcast %cst_8 : f32 to vector<64x64xf32>
    %8 = arith.maximumf %6, %7 : vector<64x64xf32>
    %9 = arith.truncf %8 : vector<64x64xf32> to vector<64x64xbf16>
    %c0_9 = arith.constant 0 : index
    %c0_10 = arith.constant 0 : index
    %10 = vector.load %arg5[%c0_9, %c0_10] : memref<64x128xbf16, #tpu.memory_space<vmem>>, vector<64x128xbf16>
    %cst_11 = arith.constant dense<0.000000e+00> : vector<64x128xf32>
    %11 = tpu.matmul %9, %10, %cst_11 {dimension_numbers = #tpu.dot_dimension_numbers<[1], [0], [0], [1], [0, 0, 1, 1], [], []>} : vector<64x64xbf16>, vector<64x128xbf16>, vector<64x128xf32> -> vector<64x128xf32>
    %12 = arith.truncf %11 : vector<64x128xf32> to vector<64x128xbf16>
    %c0_12 = arith.constant 0 : index
    %c0_13 = arith.constant 0 : index
    %13 = vector.load %arg6[%c0_12, %c0_13] : memref<64x128xbf16, #tpu.memory_space<vmem>>, vector<64x128xbf16>
    tpu.vector_store %arg6[%c0_12, %c0_13], %12 {strides = array<i32>} : memref<64x128xbf16, #tpu.memory_space<vmem>>, vector<64x128xbf16>,
    return
  }
  func.func @transform_0(%arg0: i32) -> (i32, i32) {
    %c0_i32 = arith.constant 0 : i32
    %c0_i32_0 = arith.constant 0 : i32
    return %arg0, %c0_i32 : i32, i32
  }
  func.func @transform_1(%arg0: i32) -> (i32, i32) {
    %c0_i32 = arith.constant 0 : i32
    %c0_i32_0 = arith.constant 0 : i32
    return %arg0, %c0_i32 : i32, i32
  }
  func.func @transform_2(%arg0: i32) -> (i32, i32) {
    %c0_i32 = arith.constant 0 : i32
    %c0_i32_0 = arith.constant 0 : i32
    %c0_i32_1 = arith.constant 0 : i32
    return %c0_i32, %c0_i32_0 : i32, i32
  }
  func.func @transform_3(%arg0: i32) -> (i32, i32) {
    %c0_i32 = arith.constant 0 : i32
    %c0_i32_0 = arith.constant 0 : i32
    %c0_i32_1 = arith.constant 0 : i32
    return %c0_i32, %c0_i32_0 : i32, i32
  }
  func.func @transform_4(%arg0: i32) -> (i32, i32) {
    %c0_i32 = arith.constant 0 : i32
    %c0_i32_0 = arith.constant 0 : i32
    %c0_i32_1 = arith.constant 0 : i32
    return %c0_i32, %c0_i32_0 : i32, i32
  }
  func.func @transform_5(%arg0: i32) -> (i32, i32) {
    %c0_i32 = arith.constant 0 : i32
    %c0_i32_0 = arith.constant 0 : i32
    return %arg0, %c0_i32 : i32, i32
  }
}

module attributes {stable_mosaic.version = 11 : i64} {
  func.func @_level_kernel(%arg0: i32, %arg1: memref<16x3xf32, #tpu.memory_space<vmem>>, %arg2: memref<3x32xf32, #tpu.memory_space<vmem>>, %arg3: memref<32x64xbf16, #tpu.memory_space<vmem>>, %arg4: memref<64x128xbf16, #tpu.memory_space<vmem>>, %arg5: memref<16x128xbf16, #tpu.memory_space<vmem>>) attributes {dimension_semantics = [#tpu.dimension_semantics<parallel>], iteration_bounds = array<i64: 2>, scalar_prefetch = 0 : i64, scratch_operands = 0 : i64, tpu.core_type = #tpu.core_type<tc>, window_params = [{transform_indices = @transform_0, window_bounds = array<i64: 16, 3>}, {pipeline_mode = #tpu.pipeline_mode<synchronous>, transform_indices = @transform_1, window_bounds = array<i64: 3, 32>}, {pipeline_mode = #tpu.pipeline_mode<synchronous>, transform_indices = @transform_2, window_bounds = array<i64: 32, 64>}, {pipeline_mode = #tpu.pipeline_mode<synchronous>, transform_indices = @transform_3, window_bounds = array<i64: 64, 128>}, {transform_indices = @transform_4, window_bounds = array<i64: 16, 128>}]} {
    %c0 = arith.constant 0 : index
    %c0_0 = arith.constant 0 : index
    %0 = vector.load %arg1[%c0, %c0_0] : memref<16x3xf32, #tpu.memory_space<vmem>>, vector<16x3xf32>
    %c0_1 = arith.constant 0 : index
    %c0_2 = arith.constant 0 : index
    %1 = vector.load %arg2[%c0_1, %c0_2] : memref<3x32xf32, #tpu.memory_space<vmem>>, vector<3x32xf32>
    %2 = vector.extract_strided_slice %0 {offsets = [0, 0], sizes = [16, 1], strides = [1, 1]} : vector<16x3xf32> to vector<16x1xf32>
    %3 = vector.extract_strided_slice %1 {offsets = [0, 0], sizes = [1, 32], strides = [1, 1]} : vector<3x32xf32> to vector<1x32xf32>
    %4 = vector.broadcast %2 : vector<16x1xf32> to vector<16x32xf32>
    %5 = vector.broadcast %3 : vector<1x32xf32> to vector<16x32xf32>
    %6 = arith.mulf %4, %5 : vector<16x32xf32>
    %7 = vector.extract_strided_slice %0 {offsets = [0, 1], sizes = [16, 1], strides = [1, 1]} : vector<16x3xf32> to vector<16x1xf32>
    %8 = vector.extract_strided_slice %1 {offsets = [1, 0], sizes = [1, 32], strides = [1, 1]} : vector<3x32xf32> to vector<1x32xf32>
    %9 = vector.broadcast %7 : vector<16x1xf32> to vector<16x32xf32>
    %10 = vector.broadcast %8 : vector<1x32xf32> to vector<16x32xf32>
    %11 = arith.mulf %9, %10 : vector<16x32xf32>
    %12 = arith.addf %6, %11 : vector<16x32xf32>
    %13 = vector.extract_strided_slice %0 {offsets = [0, 2], sizes = [16, 1], strides = [1, 1]} : vector<16x3xf32> to vector<16x1xf32>
    %14 = vector.extract_strided_slice %1 {offsets = [2, 0], sizes = [1, 32], strides = [1, 1]} : vector<3x32xf32> to vector<1x32xf32>
    %15 = vector.broadcast %13 : vector<16x1xf32> to vector<16x32xf32>
    %16 = vector.broadcast %14 : vector<1x32xf32> to vector<16x32xf32>
    %17 = arith.mulf %15, %16 : vector<16x32xf32>
    %18 = arith.addf %12, %17 : vector<16x32xf32>
    %cst = arith.constant 0.000000e+00 : f32
    %19 = vector.broadcast %cst : f32 to vector<16x32xf32>
    %20 = arith.maximumf %18, %19 : vector<16x32xf32>
    %21 = arith.truncf %20 : vector<16x32xf32> to vector<16x32xbf16>
    %c0_3 = arith.constant 0 : index
    %c0_4 = arith.constant 0 : index
    %22 = vector.load %arg3[%c0_3, %c0_4] : memref<32x64xbf16, #tpu.memory_space<vmem>>, vector<32x64xbf16>
    %cst_5 = arith.constant dense<0.000000e+00> : vector<16x64xf32>
    %23 = tpu.matmul %21, %22, %cst_5 {dimension_numbers = #tpu.dot_dimension_numbers<[1], [0], [0], [1], [0, 0, 1, 1], [], []>} : vector<16x32xbf16>, vector<32x64xbf16>, vector<16x64xf32> -> vector<16x64xf32>
    %cst_6 = arith.constant 0.000000e+00 : f32
    %24 = vector.broadcast %cst_6 : f32 to vector<16x64xf32>
    %25 = arith.maximumf %23, %24 : vector<16x64xf32>
    %26 = arith.truncf %25 : vector<16x64xf32> to vector<16x64xbf16>
    %c0_7 = arith.constant 0 : index
    %c0_8 = arith.constant 0 : index
    %27 = vector.load %arg4[%c0_7, %c0_8] : memref<64x128xbf16, #tpu.memory_space<vmem>>, vector<64x128xbf16>
    %cst_9 = arith.constant dense<0.000000e+00> : vector<16x128xf32>
    %28 = tpu.matmul %26, %27, %cst_9 {dimension_numbers = #tpu.dot_dimension_numbers<[1], [0], [0], [1], [0, 0, 1, 1], [], []>} : vector<16x64xbf16>, vector<64x128xbf16>, vector<16x128xf32> -> vector<16x128xf32>
    %29 = arith.truncf %28 : vector<16x128xf32> to vector<16x128xbf16>
    %c0_10 = arith.constant 0 : index
    %c0_11 = arith.constant 0 : index
    %30 = vector.load %arg5[%c0_10, %c0_11] : memref<16x128xbf16, #tpu.memory_space<vmem>>, vector<16x128xbf16>
    tpu.vector_store %arg5[%c0_10, %c0_11], %29 {strides = array<i32>} : memref<16x128xbf16, #tpu.memory_space<vmem>>, vector<16x128xbf16>,
    return
  }
  func.func @transform_0(%arg0: i32) -> (i32, i32) {
    %c0_i32 = arith.constant 0 : i32
    %c0_i32_0 = arith.constant 0 : i32
    return %arg0, %c0_i32 : i32, i32
  }
  func.func @transform_1(%arg0: i32) -> (i32, i32) {
    %c0_i32 = arith.constant 0 : i32
    %c0_i32_0 = arith.constant 0 : i32
    %c0_i32_1 = arith.constant 0 : i32
    return %c0_i32, %c0_i32_0 : i32, i32
  }
  func.func @transform_2(%arg0: i32) -> (i32, i32) {
    %c0_i32 = arith.constant 0 : i32
    %c0_i32_0 = arith.constant 0 : i32
    %c0_i32_1 = arith.constant 0 : i32
    return %c0_i32, %c0_i32_0 : i32, i32
  }
  func.func @transform_3(%arg0: i32) -> (i32, i32) {
    %c0_i32 = arith.constant 0 : i32
    %c0_i32_0 = arith.constant 0 : i32
    %c0_i32_1 = arith.constant 0 : i32
    return %c0_i32, %c0_i32_0 : i32, i32
  }
  func.func @transform_4(%arg0: i32) -> (i32, i32) {
    %c0_i32 = arith.constant 0 : i32
    %c0_i32_0 = arith.constant 0 : i32
    return %arg0, %c0_i32 : i32, i32
  }
}

</mosaic_0001>

<llo_original>
// kernel: tun_bone_forward.6
$region0: #{tun_bone_forward.6}
  #allocation0 [shape = 'u32[]', space=smem, size = 0x4, offset = 0x4, fixed_abs, tag = 'smem constant byte address 0x4 - core index']
  #allocation1 [shape = 'u32[72,128]{1,0:T(1,128)}', space=vmem, size = 0x9000, scoped, tag = 'internal scratch']
  %s0 = inlined_call_operand.vmem [shape: f32[16,3], index: 0, kind: input, shape index: {}]
  %s1 = inlined_call_operand.vmem [shape: f32[3,448], index: 1, kind: input, shape index: {}]
  %s2 = inlined_call_operand.vmem [shape: bf16[448,384], index: 2, kind: input, shape index: {}]
  %s3 = inlined_call_operand.vmem [shape: bf16[384,128], index: 3, kind: input, shape index: {}]
  %s4 = inlined_call_operand.vmem [shape: bf16[16,128], index: 4, kind: output, shape index: {0}]
  %s5 = inlined_call_operand.vmem [shape: bf16[16,128], index: 5, kind: output, shape index: {1}]
  %6 = xla_tuple %s4, %s5
  %s7 = sld [smem:[#allocation0]]
  $region34: #{tun_bone_forward.6} parent=0
    _
  %s9 = ssub.s32 1, %s7
  %s10 = scalar_select 0, %s9, %s7
  // Predicated region
  $region2: #{tun_bone_forward.6} parent=0 // pred_check
    _
  $region3: #{tun_bone_forward.6} parent=0 // pred_check_branch
    %12 = sbr.rel (0) target = $region5
  $region4: #{tun_bone_forward.6} parent=0 // pred_region
    _
  $region5: #{tun_bone_forward.6} parent=0 // pred_fallthru
    _
  // Predicated region
  $region6: #{tun_bone_forward.6} parent=0 // pred_check
    _
  $region7: #{tun_bone_forward.6} parent=0 // pred_check_branch
    %14 = sbr.rel (0) target = $region9
  $region8: #{tun_bone_forward.6} parent=0 // pred_region
    _
  $region9: #{tun_bone_forward.6} parent=0 // pred_fallthru
    _
  // Predicated region
  $region10: #{tun_bone_forward.6} parent=0 // pred_check
    _
  $region11: #{tun_bone_forward.6} parent=0 // pred_check_branch
    %16 = sbr.rel (0) target = $region13
  $region12: #{tun_bone_forward.6} parent=0 // pred_region
    _
  $region13: #{tun_bone_forward.6} parent=0 // pred_fallthru
    _
  // Predicated region
  $region14: #{tun_bone_forward.6} parent=0 // pred_check
    _
  $region15: #{tun_bone_forward.6} parent=0 // pred_check_branch
    %18 = sbr.rel (0) target = $region17
  $region16: #{tun_bone_forward.6} parent=0 // pred_region
    _
  $region17: #{tun_bone_forward.6} parent=0 // pred_fallthru
    _
  %v20 = vld [vmem:[%s0] sm:$0xff]
  %v21 = vld [vmem:[%s0 + $0x8] sm:$0xff]
  %v22 = vld [vmem:[%s1] sm:$0x77]
  %v23 = vld [vmem:[%s1 + $0x8] sm:$0x77]
  %25 = vset.pattern.permute.xlu0 0
  %26 = vperm.xlu0 %25, %v20
  %v27 = vpop.permute.xlu0 %26
  %30 = vset.pattern.permute.xlu0 0
  %31 = vperm.xlu0 %30, %v21
  %v32 = vpop.permute.xlu0 %31
  %v36 = vperm.slane %v22, 0
  %v37 = vperm.slane %v22, 4
  %v38 = vperm.slane %v23, 0
  %v39 = vperm.slane %v23, 4
  %v44 = vperm.slane %v36, 0
  %v45 = vperm.slane %v37, 0
  %v46 = vperm.slane %v38, 0
  %v47 = vperm.slane %v39, 0
  %v48 = vmul.f32 %v27, %v44
  %v49 = vmul.f32 %v27, %v45
  %v50 = vmul.f32 %v27, %v46
  %v51 = vmul.f32 %v27, %v47
  %v52 = vmul.f32 %v32, %v44
  %v53 = vmul.f32 %v32, %v45
  %v54 = vmul.f32 %v32, %v46
  %v55 = vmul.f32 %v32, %v47
  %56 = vset.pattern.permute.xlu0 1
  %57 = vperm.xlu0 %56, %v20
  %v58 = vpop.permute.xlu0 %57
  %60 = vset.pattern.permute.xlu0 1
  %61 = vperm.xlu0 %60, %v21
  %v62 = vpop.permute.xlu0 %61
  %v64 = vperm.slane %v22, 1
  %v65 = vperm.slane %v22, 5
  %v66 = vperm.slane %v23, 1
  %v67 = vperm.slane %v23, 5
  %v72 = vperm.slane %v64, 1
  %v73 = vperm.slane %v65, 1
  %v74 = vperm.slane %v66, 1
  %v75 = vperm.slane %v67, 1
  %v76 = vmul.f32 %v58, %v72
  %v77 = vmul.f32 %v58, %v73
  %v78 = vmul.f32 %v58, %v74
  %v79 = vmul.f32 %v58, %v75
  %v80 = vmul.f32 %v62, %v72
  %v81 = vmul.f32 %v62, %v73
  %v82 = vmul.f32 %v62, %v74
  %v83 = vmul.f32 %v62, %v75
  %v84 = vadd.f32 %v48, %v76
  %v85 = vadd.f32 %v49, %v77
  %v86 = vadd.f32 %v50, %v78
  %v87 = vadd.f32 %v51, %v79
  %v88 = vadd.f32 %v52, %v80
  %v89 = vadd.f32 %v53, %v81
  %v90 = vadd.f32 %v54, %v82
  %v91 = vadd.f32 %v55, %v83
  %92 = vset.pattern.permute.xlu0 2
  %93 = vperm.xlu0 %92, %v20
  %v94 = vpop.permute.xlu0 %93
  %96 = vset.pattern.permute.xlu0 2
  %97 = vperm.xlu0 %96, %v21
  %v98 = vpop.permute.xlu0 %97
  %v100 = vperm.slane %v22, 2
  %v101 = vperm.slane %v22, 6
  %v102 = vperm.slane %v23, 2
  %v103 = vperm.slane %v23, 6
  %v108 = vperm.slane %v100, 2
  %v109 = vperm.slane %v101, 2
  %v110 = vperm.slane %v102, 2
  %v111 = vperm.slane %v103, 2
  %v112 = vmul.f32 %v94, %v108
  %v113 = vmul.f32 %v94, %v109
  %v114 = vmul.f32 %v94, %v110
  %v115 = vmul.f32 %v94, %v111
  %v116 = vmul.f32 %v98, %v108
  %v117 = vmul.f32 %v98, %v109
  %v118 = vmul.f32 %v98, %v110
  %v119 = vmul.f32 %v98, %v111
  %v120 = vadd.f32 %v84, %v112
  %v121 = vadd.f32 %v85, %v113
  %v122 = vadd.f32 %v86, %v114
  %v123 = vadd.f32 %v87, %v115
  %v124 = vadd.f32 %v88, %v116
  %v125 = vadd.f32 %v89, %v117
  %v126 = vadd.f32 %v90, %v118
  %v127 = vadd.f32 %v91, %v119
  %v128 = vmax.f32 %v120, 0.0
  %v129 = vmax.f32 %v121, 0.0
  %v130 = vmax.f32 %v122, 0.0
  %v131 = vmax.f32 %v123, 0.0
  %v132 = vmax.f32 %v124, 0.0
  %v133 = vmax.f32 %v125, 0.0
  %v134 = vmax.f32 %v126, 0.0
  %v135 = vmax.f32 %v127, 0.0
  %v136 = vpack.c.bf16 %v132, %v128
  %v137 = vpack.c.bf16 %v133, %v129
  %v138 = vpack.c.bf16 %v134, %v130
  %v139 = vpack.c.bf16 %v135, %v131
  %v140 = vld [vmem:[%s2] sm:$0xff]
  %v141 = vld [vmem:[%s2 + $0x8] sm:$0xf]
  %v142 = vld [vmem:[%s2 + $0xc] sm:$0xff]
  %v143 = vld [vmem:[%s2 + $0x14] sm:$0xf]
  %v144 = vld [vmem:[%s2 + $0x18] sm:$0xff]
  %v145 = vld [vmem:[%s2 + $0x20] sm:$0xf]
  %v146 = vld [vmem:[%s2 + $0x24] sm:$0xff]
  %v147 = vld [vmem:[%s2 + $0x2c] sm:$0xf]
  %v148 = vld [vmem:[%s2 + $0x30] sm:$0xff]
  %v149 = vld [vmem:[%s2 + $0x38] sm:$0xf]
  %v150 = vld [vmem:[%s2 + $0x3c] sm:$0xff]
  %v151 = vld [vmem:[%s2 + $0x44] sm:$0xf]
  %v152 = vld [vmem:[%s2 + $0x48] sm:$0xff]
  %v153 = vld [vmem:[%s2 + $0x50] sm:$0xf]
  %v154 = vld [vmem:[%s2 + $0x54] sm:$0xff]
  %v155 = vld [vmem:[%s2 + $0x5c] sm:$0xf]
  %v156 = vld [vmem:[%s2 + $0x60] sm:$0xff]
  %v157 = vld [vmem:[%s2 + $0x68] sm:$0xf]
  %v158 = vld [vmem:[%s2 + $0x6c] sm:$0xff]
  %v159 = vld [vmem:[%s2 + $0x74] sm:$0xf]
  %v160 = vld [vmem:[%s2 + $0x78] sm:$0xff]
  %v161 = vld [vmem:[%s2 + $0x80] sm:$0xf]
  %v162 = vld [vmem:[%s2 + $0x84] sm:$0xff]
  %v163 = vld [vmem:[%s2 + $0x8c] sm:$0xf]
  %v164 = vld [vmem:[%s2 + $0x90] sm:$0xff]
  %v165 = vld [vmem:[%s2 + $0x98] sm:$0xf]
  %v166 = vld [vmem:[%s2 + $0x9c] sm:$0xff]
  %v167 = vld [vmem:[%s2 + $0xa4] sm:$0xf]
  %v168 = vld [vmem:[%s2 + $0xa8] sm:$0xff]
  %v169 = vld [vmem:[%s2 + $0xb0] sm:$0xf]
  %v170 = vld [vmem:[%s2 + $0xb4] sm:$0xff]
  %v171 = vld [vmem:[%s2 + $0xbc] sm:$0xf]
  %v172 = vld [vmem:[%s2 + $0xc0] sm:$0xff]
  %v173 = vld [vmem:[%s2 + $0xc8] sm:$0xf]
  %v174 = vld [vmem:[%s2 + $0xcc] sm:$0xff]
  %v175 = vld [vmem:[%s2 + $0xd4] sm:$0xf]
  %v176 = vld [vmem:[%s2 + $0xd8] sm:$0xff]
  %v177 = vld [vmem:[%s2 + $0xe0] sm:$0xf]
  %v178 = vld [vmem:[%s2 + $0xe4] sm:$0xff]
  %v179 = vld [vmem:[%s2 + $0xec] sm:$0xf]
  %v180 = vld [vmem:[%s2 + $0xf0] sm:$0xff]
  %v181 = vld [vmem:[%s2 + $0xf8] sm:$0xf]
  %v182 = vld [vmem:[%s2 + $0xfc] sm:$0xff]
  %v183 = vld [vmem:[%s2 + $0x104] sm:$0xf]
  %v184 = vld [vmem:[%s2 + $0x108] sm:$0xff]
  %v185 = vld [vmem:[%s2 + $0x110] sm:$0xf]
  %v186 = vld [vmem:[%s2 + $0x114] sm:$0xff]
  %v187 = vld [vmem:[%s2 + $0x11c] sm:$0xf]
  %v188 = vld [vmem:[%s2 + $0x120] sm:$0xff]
  %v189 = vld [vmem:[%s2 + $0x128] sm:$0xf]
  %v190 = vld [vmem:[%s2 + $0x12c] sm:$0xff]
  %v191 = vld [vmem:[%s2 + $0x134] sm:$0xf]
  %v192 = vld [vmem:[%s2 + $0x138] sm:$0xff]
  %v193 = vld [vmem:[%s2 + $0x140] sm:$0xf]
  %v194 = vld [vmem:[%s2 + $0x144] sm:$0xff]
  %v195 = vld [vmem:[%s2 + $0x14c] sm:$0xf]
  %v196 = vld [vmem:[%s2 + $0x150] sm:$0xff]
  %v197 = vld [vmem:[%s2 + $0x158] sm:$0xf]
  %v198 = vld [vmem:[%s2 + $0x15c] sm:$0xff]
  %v199 = vld [vmem:[%s2 + $0x164] sm:$0xf]
  %v200 = vld [vmem:[%s2 + $0x168] sm:$0xff]
  %v201 = vld [vmem:[%s2 + $0x170] sm:$0xf]
  %v202 = vld [vmem:[%s2 + $0x174] sm:$0xff]
  %v203 = vld [vmem:[%s2 + $0x17c] sm:$0xf]
  %v204 = vld [vmem:[%s2 + $0x180] sm:$0xff]
  %v205 = vld [vmem:[%s2 + $0x188] sm:$0xf]
  %v206 = vld [vmem:[%s2 + $0x18c] sm:$0xff]
  %v207 = vld [vmem:[%s2 + $0x194] sm:$0xf]
  %v208 = vld [vmem:[%s2 + $0x198] sm:$0xff]
  %v209 = vld [vmem:[%s2 + $0x1a0] sm:$0xf]
  %v210 = vld [vmem:[%s2 + $0x1a4] sm:$0xff]
  %v211 = vld [vmem:[%s2 + $0x1ac] sm:$0xf]
  %v212 = vld [vmem:[%s2 + $0x1b0] sm:$0xff]
  %v213 = vld [vmem:[%s2 + $0x1b8] sm:$0xf]
  %v214 = vld [vmem:[%s2 + $0x1bc] sm:$0xff]
  %v215 = vld [vmem:[%s2 + $0x1c4] sm:$0xf]
  %v216 = vld [vmem:[%s2 + $0x1c8] sm:$0xff]
  %v217 = vld [vmem:[%s2 + $0x1d0] sm:$0xf]
  %v218 = vld [vmem:[%s2 + $0x1d4] sm:$0xff]
  %v219 = vld [vmem:[%s2 + $0x1dc] sm:$0xf]
  %v220 = vld [vmem:[%s2 + $0x1e0] sm:$0xff]
  %v221 = vld [vmem:[%s2 + $0x1e8] sm:$0xf]
  %v222 = vld [vmem:[%s2 + $0x1ec] sm:$0xff]
  %v223 = vld [vmem:[%s2 + $0x1f4] sm:$0xf]
  %v224 = vld [vmem:[%s2 + $0x1f8] sm:$0xff]
  %v225 = vld [vmem:[%s2 + $0x200] sm:$0xf]
  %v226 = vld [vmem:[%s2 + $0x204] sm:$0xff]
  %v227 = vld [vmem:[%s2 + $0x20c] sm:$0xf]
  %v228 = vld [vmem:[%s2 + $0x210] sm:$0xff]
  %v229 = vld [vmem:[%s2 + $0x218] sm:$0xf]
  %v230 = vld [vmem:[%s2 + $0x21c] sm:$0xff]
  %v231 = vld [vmem:[%s2 + $0x224] sm:$0xf]
  %v232 = vld [vmem:[%s2 + $0x228] sm:$0xff]
  %v233 = vld [vmem:[%s2 + $0x230] sm:$0xf]
  %v234 = vld [vmem:[%s2 + $0x234] sm:$0xff]
  %v235 = vld [vmem:[%s2 + $0x23c] sm:$0xf]
  %v236 = vld [vmem:[%s2 + $0x240] sm:$0xff]
  %v237 = vld [vmem:[%s2 + $0x248] sm:$0xf]
  %v238 = vld [vmem:[%s2 + $0x24c] sm:$0xff]
  %v239 = vld [vmem:[%s2 + $0x254] sm:$0xf]
  %v240 = vld [vmem:[%s2 + $0x258] sm:$0xff]
  %v241 = vld [vmem:[%s2 + $0x260] sm:$0xf]
  %v242 = vld [vmem:[%s2 + $0x264] sm:$0xff]
  %v243 = vld [vmem:[%s2 + $0x26c] sm:$0xf]
  %v244 = vld [vmem:[%s2 + $0x270] sm:$0xff]
  %v245 = vld [vmem:[%s2 + $0x278] sm:$0xf]
  %v246 = vld [vmem:[%s2 + $0x27c] sm:$0xff]
  %v247 = vld [vmem:[%s2 + $0x284] sm:$0xf]
  %v248 = vld [vmem:[%s2 + $0x288] sm:$0xff]
  %v249 = vld [vmem:[%s2 + $0x290] sm:$0xf]
  %v250 = vld [vmem:[%s2 + $0x294] sm:$0xff]
  %v251 = vld [vmem:[%s2 + $0x29c] sm:$0xf]
  %v364 = vunpack.c.l.b16 %v140
  %v365 = vunpack.c.h.b16 %v140
  %v366 = vunpack.c.l.b16 %v141
  %v367 = vunpack.c.l.b16 %v142
  %v368 = vunpack.c.h.b16 %v142
  %v369 = vunpack.c.l.b16 %v143
  %v370 = vunpack.c.l.b16 %v144
  %v371 = vunpack.c.h.b16 %v144
  %v372 = vunpack.c.l.b16 %v145
  %v373 = vunpack.c.l.b16 %v146
  %v374 = vunpack.c.h.b16 %v146
  %v375 = vunpack.c.l.b16 %v147
  %v376 = vunpack.c.l.b16 %v148
  %v377 = vunpack.c.h.b16 %v148
  %v378 = vunpack.c.l.b16 %v149
  %v379 = vunpack.c.l.b16 %v150
  %v380 = vunpack.c.h.b16 %v150
  %v381 = vunpack.c.l.b16 %v151
  %v382 = vunpack.c.l.b16 %v152
  %v383 = vunpack.c.h.b16 %v152
  %v384 = vunpack.c.l.b16 %v153
  %v385 = vunpack.c.l.b16 %v154
  %v386 = vunpack.c.h.b16 %v154
  %v387 = vunpack.c.l.b16 %v155
  %v388 = vunpack.c.l.b16 %v156
  %v389 = vunpack.c.h.b16 %v156
  %v390 = vunpack.c.l.b16 %v157
  %v391 = vunpack.c.l.b16 %v158
  %v392 = vunpack.c.h.b16 %v158
  %v393 = vunpack.c.l.b16 %v159
  %v394 = vunpack.c.l.b16 %v160
  %v395 = vunpack.c.h.b16 %v160
  %v396 = vunpack.c.l.b16 %v161
  %v397 = vunpack.c.l.b16 %v162
  %v398 = vunpack.c.h.b16 %v162
  %v399 = vunpack.c.l.b16 %v163
  %v400 = vunpack.c.l.b16 %v164
  %v401 = vunpack.c.h.b16 %v164
  %v402 = vunpack.c.l.b16 %v165
  %v403 = vunpack.c.l.b16 %v166
  %v404 = vunpack.c.h.b16 %v166
  %v405 = vunpack.c.l.b16 %v167
  %v406 = vunpack.c.l.b16 %v168
  %v407 = vunpack.c.h.b16 %v168
  %v408 = vunpack.c.l.b16 %v169
  %v409 = vunpack.c.l.b16 %v170
  %v410 = vunpack.c.h.b16 %v170
  %v411 = vunpack.c.l.b16 %v171
  %v412 = vunpack.c.l.b16 %v172
  %v413 = vunpack.c.h.b16 %v172
  %v414 = vunpack.c.l.b16 %v173
  %v415 = vunpack.c.l.b16 %v174
  %v416 = vunpack.c.h.b16 %v174
  %v417 = vunpack.c.l.b16 %v175
  %v418 = vunpack.c.l.b16 %v176
  %v419 = vunpack.c.h.b16 %v176
  %v420 = vunpack.c.l.b16 %v177
  %v421 = vunpack.c.l.b16 %v178
  %v422 = vunpack.c.h.b16 %v178
  %v423 = vunpack.c.l.b16 %v179
  %v424 = vunpack.c.l.b16 %v180
  %v425 = vunpack.c.h.b16 %v180
  %v426 = vunpack.c.l.b16 %v181
  %v427 = vunpack.c.l.b16 %v182
  %v428 = vunpack.c.h.b16 %v182
  %v429 = vunpack.c.l.b16 %v183
  %v430 = vunpack.c.l.b16 %v184
  %v431 = vunpack.c.h.b16 %v184
  %v432 = vunpack.c.l.b16 %v185
  %v433 = vunpack.c.l.b16 %v186
  %v434 = vunpack.c.h.b16 %v186
  %v435 = vunpack.c.l.b16 %v187
  %v436 = vunpack.c.l.b16 %v188
  %v437 = vunpack.c.h.b16 %v188
  %v438 = vunpack.c.l.b16 %v189
  %v439 = vunpack.c.l.b16 %v190
  %v440 = vunpack.c.h.b16 %v190
  %v441 = vunpack.c.l.b16 %v191
  %v442 = vunpack.c.l.b16 %v192
  %v443 = vunpack.c.h.b16 %v192
  %v444 = vunpack.c.l.b16 %v193
  %v445 = vunpack.c.l.b16 %v194
  %v446 = vunpack.c.h.b16 %v194
  %v447 = vunpack.c.l.b16 %v195
  %v448 = vunpack.c.l.b16 %v196
  %v449 = vunpack.c.h.b16 %v196
  %v450 = vunpack.c.l.b16 %v197
  %v451 = vunpack.c.l.b16 %v198
  %v452 = vunpack.c.h.b16 %v198
  %v453 = vunpack.c.l.b16 %v199
  %v454 = vunpack.c.l.b16 %v200
  %v455 = vunpack.c.h.b16 %v200
  %v456 = vunpack.c.l.b16 %v201
  %v457 = vunpack.c.l.b16 %v202
  %v458 = vunpack.c.h.b16 %v202
  %v459 = vunpack.c.l.b16 %v203
  %v460 = vunpack.c.l.b16 %v204
  %v461 = vunpack.c.h.b16 %v204
  %v462 = vunpack.c.l.b16 %v205
  %v463 = vunpack.c.l.b16 %v206
  %v464 = vunpack.c.h.b16 %v206
  %v465 = vunpack.c.l.b16 %v207
  %v466 = vunpack.c.l.b16 %v208
  %v467 = vunpack.c.h.b16 %v208
  %v468 = vunpack.c.l.b16 %v209
  %v469 = vunpack.c.l.b16 %v210
  %v470 = vunpack.c.h.b16 %v210
  %v471 = vunpack.c.l.b16 %v211
  %v472 = vunpack.c.l.b16 %v212
  %v473 = vunpack.c.h.b16 %v212
  %v474 = vunpack.c.l.b16 %v213
  %v475 = vunpack.c.l.b16 %v214
  %v476 = vunpack.c.h.b16 %v214
  %v477 = vunpack.c.l.b16 %v215
  %v478 = vunpack.c.l.b16 %v216
  %v479 = vunpack.c.h.b16 %v216
  %v480 = vunpack.c.l.b16 %v217
  %v481 = vunpack.c.l.b16 %v218
  %v482 = vunpack.c.h.b16 %v218
  %v483 = vunpack.c.l.b16 %v219
  %v484 = vunpack.c.l.b16 %v220
  %v485 = vunpack.c.h.b16 %v220
  %v486 = vunpack.c.l.b16 %v221
  %v487 = vunpack.c.l.b16 %v222
  %v488 = vunpack.c.h.b16 %v222
  %v489 = vunpack.c.l.b16 %v223
  %v490 = vunpack.c.l.b16 %v224
  %v491 = vunpack.c.h.b16 %v224
  %v492 = vunpack.c.l.b16 %v225
  %v493 = vunpack.c.l.b16 %v226
  %v494 = vunpack.c.h.b16 %v226
  %v495 = vunpack.c.l.b16 %v227
  %v496 = vunpack.c.l.b16 %v228
  %v497 = vunpack.c.h.b16 %v228
  %v498 = vunpack.c.l.b16 %v229
  %v499 = vunpack.c.l.b16 %v230
  %v500 = vunpack.c.h.b16 %v230
  %v501 = vunpack.c.l.b16 %v231
  %v502 = vunpack.c.l.b16 %v232
  %v503 = vunpack.c.h.b16 %v232
  %v504 = vunpack.c.l.b16 %v233
  %v505 = vunpack.c.l.b16 %v234
  %v506 = vunpack.c.h.b16 %v234
  %v507 = vunpack.c.l.b16 %v235
  %v508 = vunpack.c.l.b16 %v236
  %v509 = vunpack.c.h.b16 %v236
  %v510 = vunpack.c.l.b16 %v237
  %v511 = vunpack.c.l.b16 %v238
  %v512 = vunpack.c.h.b16 %v238
  %v513 = vunpack.c.l.b16 %v239
  %v514 = vunpack.c.l.b16 %v240
  %v515 = vunpack.c.h.b16 %v240
  %v516 = vunpack.c.l.b16 %v241
  %v517 = vunpack.c.l.b16 %v242
  %v518 = vunpack.c.h.b16 %v242
  %v519 = vunpack.c.l.b16 %v243
  %v520 = vunpack.c.l.b16 %v244
  %v521 = vunpack.c.h.b16 %v244
  %v522 = vunpack.c.l.b16 %v245
  %v523 = vunpack.c.l.b16 %v246
  %v524 = vunpack.c.h.b16 %v246
  %v525 = vunpack.c.l.b16 %v247
  %v526 = vunpack.c.l.b16 %v248
  %v527 = vunpack.c.h.b16 %v248
  %v528 = vunpack.c.l.b16 %v249
  %v529 = vunpack.c.l.b16 %v250
  %v530 = vunpack.c.h.b16 %v250
  %v531 = vunpack.c.l.b16 %v251
  %v532 = vpack.c.b16 %v367, %v364
  %v533 = vpack.c.b16 %v368, %v365
  %v534 = vpack.c.b16 %v369, %v366
  %v535 = vpack.c.b16 %v373, %v370
  %v536 = vpack.c.b16 %v374, %v371
  %v537 = vpack.c.b16 %v375, %v372
  %v538 = vpack.c.b16 %v379, %v376
  %v539 = vpack.c.b16 %v380, %v377
  %v540 = vpack.c.b16 %v381, %v378
  %v541 = vpack.c.b16 %v385, %v382
  %v542 = vpack.c.b16 %v386, %v383
  %v543 = vpack.c.b16 %v387, %v384
  %v544 = vpack.c.b16 %v391, %v388
  %v545 = vpack.c.b16 %v392, %v389
  %v546 = vpack.c.b16 %v393, %v390
  %v547 = vpack.c.b16 %v397, %v394
  %v548 = vpack.c.b16 %v398, %v395
  %v549 = vpack.c.b16 %v399, %v396
  %v550 = vpack.c.b16 %v403, %v400
  %v551 = vpack.c.b16 %v404, %v401
  %v552 = vpack.c.b16 %v405, %v402
  %v553 = vpack.c.b16 %v409, %v406
  %v554 = vpack.c.b16 %v410, %v407
  %v555 = vpack.c.b16 %v411, %v408
  %v556 = vpack.c.b16 %v415, %v412
  %v557 = vpack.c.b16 %v416, %v413
  %v558 = vpack.c.b16 %v417, %v414
  %v559 = vpack.c.b16 %v421, %v418
  %v560 = vpack.c.b16 %v422, %v419
  %v561 = vpack.c.b16 %v423, %v420
  %v562 = vpack.c.b16 %v427, %v424
  %v563 = vpack.c.b16 %v428, %v425
  %v564 = vpack.c.b16 %v429, %v426
  %v565 = vpack.c.b16 %v433, %v430
  %v566 = vpack.c.b16 %v434, %v431
  %v567 = vpack.c.b16 %v435, %v432
  %v568 = vpack.c.b16 %v439, %v436
  %v569 = vpack.c.b16 %v440, %v437
  %v570 = vpack.c.b16 %v441, %v438
  %v571 = vpack.c.b16 %v445, %v442
  %v572 = vpack.c.b16 %v446, %v443
  %v573 = vpack.c.b16 %v447, %v444
  %v574 = vpack.c.b16 %v451, %v448
  %v575 = vpack.c.b16 %v452, %v449
  %v576 = vpack.c.b16 %v453, %v450
  %v577 = vpack.c.b16 %v457, %v454
  %v578 = vpack.c.b16 %v458, %v455
  %v579 = vpack.c.b16 %v459, %v456
  %v580 = vpack.c.b16 %v463, %v460
  %v581 = vpack.c.b16 %v464, %v461
  %v582 = vpack.c.b16 %v465, %v462
  %v583 = vpack.c.b16 %v469, %v466
  %v584 = vpack.c.b16 %v470, %v467
  %v585 = vpack.c.b16 %v471, %v468
  %v586 = vpack.c.b16 %v475, %v472
  %v587 = vpack.c.b16 %v476, %v473
  %v588 = vpack.c.b16 %v477, %v474
  %v589 = vpack.c.b16 %v481, %v478
  %v590 = vpack.c.b16 %v482, %v479
  %v591 = vpack.c.b16 %v483, %v480
  %v592 = vpack.c.b16 %v487, %v484
  %v593 = vpack.c.b16 %v488, %v485
  %v594 = vpack.c.b16 %v489, %v486
  %v595 = vpack.c.b16 %v493, %v490
  %v596 = vpack.c.b16 %v494, %v491
  %v597 = vpack.c.b16 %v495, %v492
  %v598 = vpack.c.b16 %v499, %v496
  %v599 = vpack.c.b16 %v500, %v497
  %v600 = vpack.c.b16 %v501, %v498
  %v601 = vpack.c.b16 %v505, %v502
  %v602 = vpack.c.b16 %v506, %v503
  %v603 = vpack.c.b16 %v507, %v504
  %v604 = vpack.c.b16 %v511, %v508
  %v605 = vpack.c.b16 %v512, %v509
  %v606 = vpack.c.b16 %v513, %v510
  %v607 = vpack.c.b16 %v517, %v514
  %v608 = vpack.c.b16 %v518, %v515
  %v609 = vpack.c.b16 %v519, %v516
  %v610 = vpack.c.b16 %v523, %v520
  %v611 = vpack.c.b16 %v524, %v521
  %v612 = vpack.c.b16 %v525, %v522
  %v613 = vpack.c.b16 %v529, %v526
  %v614 = vpack.c.b16 %v530, %v527
  %v615 = vpack.c.b16 %v531, %v528
  %vm700 = vcmask 523264
  %v702 = vsel %vm700, %v139, 0
  %704 = vmatpush.bf16.msra.mxu0 %v553
  %705 = vmatpush.bf16.msra.mxu0 %v550
  %706 = vmatpush.bf16.msra.mxu0 %v547
  %707 = vmatpush.bf16.msra.mxu0 %v544
  %708 = vmatpush.bf16.msra.mxu0 %v541
  %709 = vmatpush.bf16.msra.mxu0 %v538
  %710 = vmatpush.bf16.msra.mxu0 %v535
  %711 = vmatpush.bf16.msra.mxu0 %v532
  %712 = vmatmul.bf16.gmra.mxu0 %v136
  %v713 = vpop.f32.mrf.mxu0
  %v714 = vadd.f32 0.0, %v713
  %v715 = vpop.f32.mrf.mxu0
  %v716 = vadd.f32 0.0, %v715
  %717 = vdwg.mxu0
  %718 = vmatpush.bf16.msra.mxu0 %v577
  %719 = vmatpush.bf16.msra.mxu0 %v574
  %720 = vmatpush.bf16.msra.mxu0 %v571
  %721 = vmatpush.bf16.msra.mxu0 %v568
  %722 = vmatpush.bf16.msra.mxu0 %v565
  %723 = vmatpush.bf16.msra.mxu0 %v562
  %724 = vmatpush.bf16.msra.mxu0 %v559
  %725 = vmatpush.bf16.msra.mxu0 %v556
  %726 = vmatmul.bf16.gmra.mxu0 %v137
  %v727 = vpop.f32.mrf.mxu0
  %v728 = vadd.f32 %v714, %v727
  %v729 = vpop.f32.mrf.mxu0
  %v730 = vadd.f32 %v716, %v729
  %731 = vdwg.mxu0
  %732 = vmatpush.bf16.msra.mxu0 %v601
  %733 = vmatpush.bf16.msra.mxu0 %v598
  %734 = vmatpush.bf16.msra.mxu0 %v595
  %735 = vmatpush.bf16.msra.mxu0 %v592
  %736 = vmatpush.bf16.msra.mxu0 %v589
  %737 = vmatpush.bf16.msra.mxu0 %v586
  %738 = vmatpush.bf16.msra.mxu0 %v583
  %739 = vmatpush.bf16.msra.mxu0 %v580
  %740 = vmatmul.bf16.gmra.mxu0 %v138
  %v741 = vpop.f32.mrf.mxu0
  %v742 = vadd.f32 %v728, %v741
  %v743 = vpop.f32.mrf.mxu0
  %v744 = vadd.f32 %v730, %v743
  %745 = vdwg.mxu0
  %746 = vmatpush.bf16.msra.mxu0 0
  %747 = vmatpush.bf16.msra.mxu0 0
  %748 = vmatpush.bf16.msra.mxu0 0
  %749 = vmatpush.bf16.msra.mxu0 0
  %750 = vmatpush.bf16.msra.mxu0 %v613
  %751 = vmatpush.bf16.msra.mxu0 %v610
  %752 = vmatpush.bf16.msra.mxu0 %v607
  %753 = vmatpush.bf16.msra.mxu0 %v604
  %754 = vmatmul.bf16.gmra.mxu0 %v702
  %v755 = vpop.f32.mrf.mxu0
  %v756 = vadd.f32 %v742, %v755
  %v757 = vpop.f32.mrf.mxu0
  %v758 = vadd.f32 %v744, %v757
  %759 = vdwg.mxu0
  %760 = vmatpush.bf16.msra.mxu0 %v554
  %761 = vmatpush.bf16.msra.mxu0 %v551
  %762 = vmatpush.bf16.msra.mxu0 %v548
  %763 = vmatpush.bf16.msra.mxu0 %v545
  %764 = vmatpush.bf16.msra.mxu0 %v542
  %765 = vmatpush.bf16.msra.mxu0 %v539
  %766 = vmatpush.bf16.msra.mxu0 %v536
  %767 = vmatpush.bf16.msra.mxu0 %v533
  %768 = vmatmul.bf16.gmra.mxu0 %v136
  %v769 = vpop.f32.mrf.mxu0
  %v770 = vadd.f32 0.0, %v769
  %v771 = vpop.f32.mrf.mxu0
  %v772 = vadd.f32 0.0, %v771
  %773 = vdwg.mxu0
  %774 = vmatpush.bf16.msra.mxu0 %v578
  %775 = vmatpush.bf16.msra.mxu0 %v575
  %776 = vmatpush.bf16.msra.mxu0 %v572
  %777 = vmatpush.bf16.msra.mxu0 %v569
  %778 = vmatpush.bf16.msra.mxu0 %v566
  %779 = vmatpush.bf16.msra.mxu0 %v563
  %780 = vmatpush.bf16.msra.mxu0 %v560
  %781 = vmatpush.bf16.msra.mxu0 %v557
  %782 = vmatmul.bf16.gmra.mxu0 %v137
  %v783 = vpop.f32.mrf.mxu0
  %v784 = vadd.f32 %v770, %v783
  %v785 = vpop.f32.mrf.mxu0
  %v786 = vadd.f32 %v772, %v785
  %787 = vdwg.mxu0
  %788 = vmatpush.bf16.msra.mxu0 %v602
  %789 = vmatpush.bf16.msra.mxu0 %v599
  %790 = vmatpush.bf16.msra.mxu0 %v596
  %791 = vmatpush.bf16.msra.mxu0 %v593
  %792 = vmatpush.bf16.msra.mxu0 %v590
  %793 = vmatpush.bf16.msra.mxu0 %v587
  %794 = vmatpush.bf16.msra.mxu0 %v584
  %795 = vmatpush.bf16.msra.mxu0 %v581
  %796 = vmatmul.bf16.gmra.mxu0 %v138
  %v797 = vpop.f32.mrf.mxu0
  %v798 = vadd.f32 %v784, %v797
  %v799 = vpop.f32.mrf.mxu0
  %v800 = vadd.f32 %v786, %v799
  %801 = vdwg.mxu0
  %802 = vmatpush.bf16.msra.mxu0 0
  %803 = vmatpush.bf16.msra.mxu0 0
  %804 = vmatpush.bf16.msra.mxu0 0
  %805 = vmatpush.bf16.msra.mxu0 0
  %806 = vmatpush.bf16.msra.mxu0 %v614
  %807 = vmatpush.bf16.msra.mxu0 %v611
  %808 = vmatpush.bf16.msra.mxu0 %v608
  %809 = vmatpush.bf16.msra.mxu0 %v605
  %810 = vmatmul.bf16.gmra.mxu0 %v702
  %v811 = vpop.f32.mrf.mxu0
  %v812 = vadd.f32 %v798, %v811
  %v813 = vpop.f32.mrf.mxu0
  %v814 = vadd.f32 %v800, %v813
  %815 = vdwg.mxu0
  %816 = vmatpush.bf16.msra.mxu0 %v555
  %817 = vmatpush.bf16.msra.mxu0 %v552
  %818 = vmatpush.bf16.msra.mxu0 %v549
  %819 = vmatpush.bf16.msra.mxu0 %v546
  %820 = vmatpush.bf16.msra.mxu0 %v543
  %821 = vmatpush.bf16.msra.mxu0 %v540
  %822 = vmatpush.bf16.msra.mxu0 %v537
  %823 = vmatpush.bf16.msra.mxu0 %v534
  %824 = vmatmul.bf16.gmra.mxu0 %v136
  %v825 = vpop.f32.mrf.mxu0
  %v826 = vadd.f32 0.0, %v825
  %v827 = vpop.f32.mrf.mxu0
  %v828 = vadd.f32 0.0, %v827
  %829 = vdwg.mxu0
  %830 = vmatpush.bf16.msra.mxu0 %v579
  %831 = vmatpush.bf16.msra.mxu0 %v576
  %832 = vmatpush.bf16.msra.mxu0 %v573
  %833 = vmatpush.bf16.msra.mxu0 %v570
  %834 = vmatpush.bf16.msra.mxu0 %v567
  %835 = vmatpush.bf16.msra.mxu0 %v564
  %836 = vmatpush.bf16.msra.mxu0 %v561
  %837 = vmatpush.bf16.msra.mxu0 %v558
  %838 = vmatmul.bf16.gmra.mxu0 %v137
  %v839 = vpop.f32.mrf.mxu0
  %v840 = vadd.f32 %v826, %v839
  %v841 = vpop.f32.mrf.mxu0
  %v842 = vadd.f32 %v828, %v841
  %843 = vdwg.mxu0
  %844 = vmatpush.bf16.msra.mxu0 %v603
  %845 = vmatpush.bf16.msra.mxu0 %v600
  %846 = vmatpush.bf16.msra.mxu0 %v597
  %847 = vmatpush.bf16.msra.mxu0 %v594
  %848 = vmatpush.bf16.msra.mxu0 %v591
  %849 = vmatpush.bf16.msra.mxu0 %v588
  %850 = vmatpush.bf16.msra.mxu0 %v585
  %851 = vmatpush.bf16.msra.mxu0 %v582
  %852 = vmatmul.bf16.gmra.mxu0 %v138
  %v853 = vpop.f32.mrf.mxu0
  %v854 = vadd.f32 %v840, %v853
  %v855 = vpop.f32.mrf.mxu0
  %v856 = vadd.f32 %v842, %v855
  %857 = vdwg.mxu0
  %858 = vmatpush.bf16.msra.mxu0 0
  %859 = vmatpush.bf16.msra.mxu0 0
  %860 = vmatpush.bf16.msra.mxu0 0
  %861 = vmatpush.bf16.msra.mxu0 0
  %862 = vmatpush.bf16.msra.mxu0 %v615
  %863 = vmatpush.bf16.msra.mxu0 %v612
  %864 = vmatpush.bf16.msra.mxu0 %v609
  %865 = vmatpush.bf16.msra.mxu0 %v606
  %866 = vmatmul.bf16.gmra.mxu0 %v702
  %v867 = vpop.f32.mrf.mxu0
  %v868 = vadd.f32 %v854, %v867
  %v869 = vpop.f32.mrf.mxu0
  %v870 = vadd.f32 %v856, %v869
  %871 = vdwg.mxu0
  %v872 = vmax.f32 %v756, 0.0
  %v873 = vmax.f32 %v812, 0.0
  %v874 = vmax.f32 %v868, 0.0
  %v875 = vmax.f32 %v758, 0.0
  %v876 = vmax.f32 %v814, 0.0
  %v877 = vmax.f32 %v870, 0.0
  %v878 = vpack.c.bf16 %v873, %v872
  %v879 = vpack.c.bf16 %v874, %v874
  %v880 = vpack.c.bf16 %v876, %v875
  %v881 = vpack.c.bf16 %v877, %v877
  %882 = vst [vmem:[%s4] sm:$0xf] %v879
  %883 = vst [vmem:[%s4 + $0x4] sm:$0xf] %v881
  %v884 = vld [vmem:[%s3] sm:$0xf]
  %v885 = vld [vmem:[%s3 + $0x4] sm:$0xf]
  %v886 = vld [vmem:[%s3 + $0x8] sm:$0xf]
  %v887 = vld [vmem:[%s3 + $0xc] sm:$0xf]
  %v888 = vld [vmem:[%s3 + $0x10] sm:$0xf]
  %v889 = vld [vmem:[%s3 + $0x14] sm:$0xf]
  %v890 = vld [vmem:[%s3 + $0x18] sm:$0xf]
  %v891 = vld [vmem:[%s3 + $0x1c] sm:$0xf]
  %v892 = vld [vmem:[%s3 + $0x20] sm:$0xf]
  %v893 = vld [vmem:[%s3 + $0x24] sm:$0xf]
  %v894 = vld [vmem:[%s3 + $0x28] sm:$0xf]
  %v895 = vld [vmem:[%s3 + $0x2c] sm:$0xf]
  %v896 = vld [vmem:[%s3 + $0x30] sm:$0xf]
  %v897 = vld [vmem:[%s3 + $0x34] sm:$0xf]
  %v898 = vld [vmem:[%s3 + $0x38] sm:$0xf]
  %v899 = vld [vmem:[%s3 + $0x3c] sm:$0xf]
  %v900 = vld [vmem:[%s3 + $0x40] sm:$0xf]
  %v901 = vld [vmem:[%s3 + $0x44] sm:$0xf]
  %v902 = vld [vmem:[%s3 + $0x48] sm:$0xf]
  %v903 = vld [vmem:[%s3 + $0x4c] sm:$0xf]
  %v904 = vld [vmem:[%s3 + $0x50] sm:$0xf]
  %v905 = vld [vmem:[%s3 + $0x54] sm:$0xf]
  %v906 = vld [vmem:[%s3 + $0x58] sm:$0xf]
  %v907 = vld [vmem:[%s3 + $0x5c] sm:$0xf]
  %v908 = vld [vmem:[%s3 + $0x60] sm:$0xf]
  %v909 = vld [vmem:[%s3 + $0x64] sm:$0xf]
  %v910 = vld [vmem:[%s3 + $0x68] sm:$0xf]
  %v911 = vld [vmem:[%s3 + $0x6c] sm:$0xf]
  %v912 = vld [vmem:[%s3 + $0x70] sm:$0xf]
  %v913 = vld [vmem:[%s3 + $0x74] sm:$0xf]
  %v914 = vld [vmem:[%s3 + $0x78] sm:$0xf]
  %v915 = vld [vmem:[%s3 + $0x7c] sm:$0xf]
  %v916 = vld [vmem:[%s3 + $0x80] sm:$0xf]
  %v917 = vld [vmem:[%s3 + $0x84] sm:$0xf]
  %v918 = vld [vmem:[%s3 + $0x88] sm:$0xf]
  %v919 = vld [vmem:[%s3 + $0x8c] sm:$0xf]
  %v920 = vld [vmem:[%s3 + $0x90] sm:$0xf]
  %v921 = vld [vmem:[%s3 + $0x94] sm:$0xf]
  %v922 = vld [vmem:[%s3 + $0x98] sm:$0xf]
  %v923 = vld [vmem:[%s3 + $0x9c] sm:$0xf]
  %v924 = vld [vmem:[%s3 + $0xa0] sm:$0xf]
  %v925 = vld [vmem:[%s3 + $0xa4] sm:$0xf]
  %v926 = vld [vmem:[%s3 + $0xa8] sm:$0xf]
  %v927 = vld [vmem:[%s3 + $0xac] sm:$0xf]
  %v928 = vld [vmem:[%s3 + $0xb0] sm:$0xf]
  %v929 = vld [vmem:[%s3 + $0xb4] sm:$0xf]
  %v930 = vld [vmem:[%s3 + $0xb8] sm:$0xf]
  %v931 = vld [vmem:[%s3 + $0xbc] sm:$0xf]
  %v936 = vunpack.c.l.b16 %v878
  %v937 = vunpack.c.h.b16 %v878
  %v938 = vunpack.c.l.b16 %v879
  %v939 = vunpack.c.l.b16 %v880
  %v940 = vunpack.c.h.b16 %v880
  %v941 = vunpack.c.l.b16 %v881
  %v942 = vpack.c.b16 %v939, %v936
  %v943 = vpack.c.b16 %v940, %v937
  %v944 = vpack.c.b16 %v941, %v938
  %v996 = vunpack.c.l.b16 %v884
  %v997 = vunpack.c.l.b16 %v885
  %v998 = vunpack.c.l.b16 %v886
  %v999 = vunpack.c.l.b16 %v887
  %v1000 = vunpack.c.l.b16 %v888
  %v1001 = vunpack.c.l.b16 %v889
  %v1002 = vunpack.c.l.b16 %v890
  %v1003 = vunpack.c.l.b16 %v891
  %v1004 = vunpack.c.l.b16 %v892
  %v1005 = vunpack.c.l.b16 %v893
  %v1006 = vunpack.c.l.b16 %v894
  %v1007 = vunpack.c.l.b16 %v895
  %v1008 = vunpack.c.l.b16 %v896
  %v1009 = vunpack.c.l.b16 %v897
  %v1010 = vunpack.c.l.b16 %v898
  %v1011 = vunpack.c.l.b16 %v899
  %v1012 = vunpack.c.l.b16 %v900
  %v1013 = vunpack.c.l.b16 %v901
  %v1014 = vunpack.c.l.b16 %v902
  %v1015 = vunpack.c.l.b16 %v903
  %v1016 = vunpack.c.l.b16 %v904
  %v1017 = vunpack.c.l.b16 %v905
  %v1018 = vunpack.c.l.b16 %v906
  %v1019 = vunpack.c.l.b16 %v907
  %v1020 = vunpack.c.l.b16 %v908
  %v1021 = vunpack.c.l.b16 %v909
  %v1022 = vunpack.c.l.b16 %v910
  %v1023 = vunpack.c.l.b16 %v911
  %v1024 = vunpack.c.l.b16 %v912
  %v1025 = vunpack.c.l.b16 %v913
  %v1026 = vunpack.c.l.b16 %v914
  %v1027 = vunpack.c.l.b16 %v915
  %v1028 = vunpack.c.l.b16 %v916
  %v1029 = vunpack.c.l.b16 %v917
  %v1030 = vunpack.c.l.b16 %v918
  %v1031 = vunpack.c.l.b16 %v919
  %v1032 = vunpack.c.l.b16 %v920
  %v1033 = vunpack.c.l.b16 %v921
  %v1034 = vunpack.c.l.b16 %v922
  %v1035 = vunpack.c.l.b16 %v923
  %v1036 = vunpack.c.l.b16 %v924
  %v1037 = vunpack.c.l.b16 %v925
  %v1038 = vunpack.c.l.b16 %v926
  %v1039 = vunpack.c.l.b16 %v927
  %v1040 = vunpack.c.l.b16 %v928
  %v1041 = vunpack.c.l.b16 %v929
  %v1042 = vunpack.c.l.b16 %v930
  %v1043 = vunpack.c.l.b16 %v931
  %v1044 = vpack.c.b16 %v997, %v996
  %v1045 = vpack.c.b16 %v999, %v998
  %v1046 = vpack.c.b16 %v1001, %v1000
  %v1047 = vpack.c.b16 %v1003, %v1002
  %v1048 = vpack.c.b16 %v1005, %v1004
  %v1049 = vpack.c.b16 %v1007, %v1006
  %v1050 = vpack.c.b16 %v1009, %v1008
  %v1051 = vpack.c.b16 %v1011, %v1010
  %v1052 = vpack.c.b16 %v1013, %v1012
  %v1053 = vpack.c.b16 %v1015, %v1014
  %v1054 = vpack.c.b16 %v1017, %v1016
  %v1055 = vpack.c.b16 %v1019, %v1018
  %v1056 = vpack.c.b16 %v1021, %v1020
  %v1057 = vpack.c.b16 %v1023, %v1022
  %v1058 = vpack.c.b16 %v1025, %v1024
  %v1059 = vpack.c.b16 %v1027, %v1026
  %v1060 = vpack.c.b16 %v1029, %v1028
  %v1061 = vpack.c.b16 %v1031, %v1030
  %v1062 = vpack.c.b16 %v1033, %v1032
  %v1063 = vpack.c.b16 %v1035, %v1034
  %v1064 = vpack.c.b16 %v1037, %v1036
  %v1065 = vpack.c.b16 %v1039, %v1038
  %v1066 = vpack.c.b16 %v1041, %v1040
  %v1067 = vpack.c.b16 %v1043, %v1042
  %1092 = vmatpush.bf16.msra.mxu0 %v1051
  %1093 = vmatpush.bf16.msra.mxu0 %v1050
  %1094 = vmatpush.bf16.msra.mxu0 %v1049
  %1095 = vmatpush.bf16.msra.mxu0 %v1048
  %1096 = vmatpush.bf16.msra.mxu0 %v1047
  %1097 = vmatpush.bf16.msra.mxu0 %v1046
  %1098 = vmatpush.bf16.msra.mxu0 %v1045
  %1099 = vmatpush.bf16.msra.mxu0 %v1044
  %1100 = vmatmul.bf16.gmra.mxu0 %v942
  %v1101 = vpop.f32.mrf.mxu0
  %v1102 = vadd.f32 0.0, %v1101
  %v1103 = vpop.f32.mrf.mxu0
  %v1104 = vadd.f32 0.0, %v1103
  %1105 = vdwg.mxu0
  %1106 = vmatpush.bf16.msra.mxu0 %v1059
  %1107 = vmatpush.bf16.msra.mxu0 %v1058
  %1108 = vmatpush.bf16.msra.mxu0 %v1057
  %1109 = vmatpush.bf16.msra.mxu0 %v1056
  %1110 = vmatpush.bf16.msra.mxu0 %v1055
  %1111 = vmatpush.bf16.msra.mxu0 %v1054
  %1112 = vmatpush.bf16.msra.mxu0 %v1053
  %1113 = vmatpush.bf16.msra.mxu0 %v1052
  %1114 = vmatmul.bf16.gmra.mxu0 %v943
  %v1115 = vpop.f32.mrf.mxu0
  %v1116 = vadd.f32 %v1102, %v1115
  %v1117 = vpop.f32.mrf.mxu0
  %v1118 = vadd.f32 %v1104, %v1117
  %1119 = vdwg.mxu0
  %1120 = vmatpush.bf16.msra.mxu0 %v1067
  %1121 = vmatpush.bf16.msra.mxu0 %v1066
  %1122 = vmatpush.bf16.msra.mxu0 %v1065
  %1123 = vmatpush.bf16.msra.mxu0 %v1064
  %1124 = vmatpush.bf16.msra.mxu0 %v1063
  %1125 = vmatpush.bf16.msra.mxu0 %v1062
  %1126 = vmatpush.bf16.msra.mxu0 %v1061
  %1127 = vmatpush.bf16.msra.mxu0 %v1060
  %1128 = vmatmul.bf16.gmra.mxu0 %v944
  %v1129 = vpop.f32.mrf.mxu0
  %v1130 = vadd.f32 %v1116, %v1129
  %v1131 = vpop.f32.mrf.mxu0
  %v1132 = vadd.f32 %v1118, %v1131
  %1133 = vdwg.mxu0
  %v1134 = vpack.c.bf16 %v1130, %v1130
  %v1135 = vpack.c.bf16 %v1132, %v1132
  %1136 = vst [vmem:[%s5] sm:$0xf] %v1134
  %1137 = vst [vmem:[%s5 + $0x4] sm:$0xf] %v1135
  // Predicated region
  $region18: #{tun_bone_forward.6} parent=0 // pred_check
    _
  $region19: #{tun_bone_forward.6} parent=0 // pred_check_branch
    %1139 = sbr.rel (0) target = $region21
  $region20: #{tun_bone_forward.6} parent=0 // pred_region
    _
  $region21: #{tun_bone_forward.6} parent=0 // pred_fallthru
    _
  // Predicated region
  $region22: #{tun_bone_forward.6} parent=0 // pred_check
    _
  $region23: #{tun_bone_forward.6} parent=0 // pred_check_branch
    %1141 = sbr.rel (0) target = $region25
  $region24: #{tun_bone_forward.6} parent=0 // pred_region
    _
  $region25: #{tun_bone_forward.6} parent=0 // pred_fallthru
    _
  // Predicated region
  $region26: #{tun_bone_forward.6} parent=0 // pred_check
    _
  $region27: #{tun_bone_forward.6} parent=0 // pred_check_branch
    %1143 = sbr.rel (0) target = $region29
  $region28: #{tun_bone_forward.6} parent=0 // pred_region
    _
  $region29: #{tun_bone_forward.6} parent=0 // pred_fallthru
    _
  // Predicated region
  $region30: #{tun_bone_forward.6} parent=0 // pred_check
    _
  $region31: #{tun_bone_forward.6} parent=0 // pred_check_branch
    %1145 = sbr.rel (0) target = $region33
  $region32: #{tun_bone_forward.6} parent=0 // pred_region
    _
  $region33: #{tun_bone_forward.6} parent=0 // pred_fallthru
    _

// kernel: tun_bone_forward.4
$region0: #{tun_bone_forward.4}
  #allocation0 [shape = 'u32[]', space=smem, size = 0x4, offset = 0x4, fixed_abs, tag = 'smem constant byte address 0x4 - core index']
  #allocation1 [shape = 'u32[72,128]{1,0:T(1,128)}', space=vmem, size = 0x9000, scoped, tag = 'internal scratch']
  %s0 = inlined_call_operand.vmem [shape: f32[128,3], index: 0, kind: input, shape index: {}]
  %s1 = inlined_call_operand.vmem [shape: f32[3,16], index: 1, kind: input, shape index: {}]
  %s2 = inlined_call_operand.vmem [shape: bf16[16,32], index: 2, kind: input, shape index: {}]
  %s3 = inlined_call_operand.vmem [shape: bf16[32,128], index: 3, kind: input, shape index: {}]
  %s4 = inlined_call_operand.vmem [shape: bf16[128,32], index: 4, kind: output, shape index: {0}]
  %s5 = inlined_call_operand.vmem [shape: bf16[128,128], index: 5, kind: output, shape index: {1}]
  %6 = xla_tuple %s4, %s5
  %s7 = sld [smem:[#allocation0]]
  $region57: #{tun_bone_forward.4} parent=0
    _
  %s9 = ssub.s32 1, %s7
  %s10 = scalar_select 0, %s9, %s7
  loop: start=0, step=1, limit=4
  $region2: #{tun_bone_forward.4} parent=0 // loop_pre_header
    _
  $region3: #{tun_bone_forward.4} parent=0 // loop_header
    %s12 = sphi 0, %s16
    %p13 = scmp.ge.s32.totalorder %s12, 4
    %s22 = sphi 0, %s24
    %s25 = sphi 0, %s22
    %s26 = sphi 0, %s25
    %s42 = sphi 0, %s26
    %s46 = sphi 0, %s46
    %s48 = sphi 0, %s46
    %s49 = sphi 0, %s48
    %s63 = sphi 0, %s49
    %s67 = sphi 0, %s67
    %s69 = sphi 0, %s67
    %s70 = sphi 0, %s69
    %s84 = sphi 0, %s70
    %s88 = sphi 0, %s88
    %s90 = sphi 0, %s88
    %s91 = sphi 0, %s90
    %s105 = sphi 0, %s91
    %s111 = sphi 0, %s113
    %s114 = sphi 0, %s111
    %s115 = sphi 0, %s114
    %s131 = sphi 0, %s115
    %s137 = sphi 0, %s139
    %s140 = sphi 0, %s137
    %s141 = sphi 0, %s140
    %s157 = sphi 0, %s141
  $region4: #{tun_bone_forward.4} parent=0 // loop_header_branch
    %15 = sbr.rel (%p13) target = $region8
  $region5: #{tun_bone_forward.4} parent=0 // loop_body
    %s17 = ssub.s32 %s12, 1
    %s18 = ssub.s32 %s12, 2
    %s19 = sadd.s32 %s12, 1
    %s20 = ssub.s32 %s12, %s19
    %p21 = scmp.eq.s32.totalorder %s20, 0
    %s23 = sadd.s32 %s22, 1
    %s24 = scalar_select %p21, %s22, %s23
    %p27 = pneg %p21
    %p28 = scmp.eq.s32.totalorder %s12, 1
    %p29 = por %p27, %p28
    %p30 = scmp.ne.s32.totalorder %s22, %s25
    %p31 = scmp.eq.s32.totalorder %s12, 0
    %p32 = por %p30, %p31
    %p33 = scmp.ne.s32.totalorder %s22, %s25
    %p34 = scmp.eq.s32.totalorder %s17, 1
    %p35 = por %p33, %p34
    %p36 = scmp.ne.s32.totalorder %s25, %s26
    %p37 = scmp.eq.s32.totalorder %s17, 0
    %p38 = por %p36, %p37
    %p39 = scmp.ne.s32.totalorder %s25, %s26
    %p40 = scmp.eq.s32.totalorder %s18, 1
    %p41 = por %p39, %p40
    %p43 = scmp.ne.s32.totalorder %s26, %s42
    %p44 = scmp.eq.s32.totalorder %s18, 0
    %p45 = por %p43, %p44
    %s47 = sadd.s32 %s46, 1
    %p50 = scmp.eq.s32.totalorder %s12, 1
    %p51 = scmp.ne.s32.totalorder %s46, %s48
    %p52 = scmp.eq.s32.totalorder %s12, 0
    %p53 = por %p51, %p52
    %p54 = scmp.ne.s32.totalorder %s46, %s48
    %p55 = scmp.eq.s32.totalorder %s17, 1
    %p56 = por %p54, %p55
    %p57 = scmp.ne.s32.totalorder %s48, %s49
    %p58 = scmp.eq.s32.totalorder %s17, 0
    %p59 = por %p57, %p58
    %p60 = scmp.ne.s32.totalorder %s48, %s49
    %p61 = scmp.eq.s32.totalorder %s18, 1
    %p62 = por %p60, %p61
    %p64 = scmp.ne.s32.totalorder %s49, %s63
    %p65 = scmp.eq.s32.totalorder %s18, 0
    %p66 = por %p64, %p65
    %s68 = sadd.s32 %s67, 1
    %p71 = scmp.eq.s32.totalorder %s12, 1
    %p72 = scmp.ne.s32.totalorder %s67, %s69
    %p73 = scmp.eq.s32.totalorder %s12, 0
    %p74 = por %p72, %p73
    %p75 = scmp.ne.s32.totalorder %s67, %s69
    %p76 = scmp.eq.s32.totalorder %s17, 1
    %p77 = por %p75, %p76
    %p78 = scmp.ne.s32.totalorder %s69, %s70
    %p79 = scmp.eq.s32.totalorder %s17, 0
    %p80 = por %p78, %p79
    %p81 = scmp.ne.s32.totalorder %s69, %s70
    %p82 = scmp.eq.s32.totalorder %s18, 1
    %p83 = por %p81, %p82
    %p85 = scmp.ne.s32.totalorder %s70, %s84
    %p86 = scmp.eq.s32.totalorder %s18, 0
    %p87 = por %p85, %p86
    %s89 = sadd.s32 %s88, 1
    %p92 = scmp.eq.s32.totalorder %s12, 1
    %p93 = scmp.ne.s32.totalorder %s88, %s90
    %p94 = scmp.eq.s32.totalorder %s12, 0
    %p95 = por %p93, %p94
    %p96 = scmp.ne.s32.totalorder %s88, %s90
    %p97 = scmp.eq.s32.totalorder %s17, 1
    %p98 = por %p96, %p97
    %p99 = scmp.ne.s32.totalorder %s90, %s91
    %p100 = scmp.eq.s32.totalorder %s17, 0
    %p101 = por %p99, %p100
    %p102 = scmp.ne.s32.totalorder %s90, %s91
    %p103 = scmp.eq.s32.totalorder %s18, 1
    %p104 = por %p102, %p103
    %p106 = scmp.ne.s32.totalorder %s91, %s105
    %p107 = scmp.eq.s32.totalorder %s18, 0
    %p108 = por %p106, %p107
    %s109 = ssub.s32 %s12, %s19
    %p110 = scmp.eq.s32.totalorder %s109, 0
    %s112 = sadd.s32 %s111, 1
    %s113 = scalar_select %p110, %s111, %s112
    %p116 = pneg %p110
    %p117 = scmp.eq.s32.totalorder %s12, 1
    %p118 = por %p116, %p117
    %p119 = scmp.ne.s32.totalorder %s111, %s114
    %p120 = scmp.eq.s32.totalorder %s12, 0
    %p121 = por %p119, %p120
    %p122 = scmp.ne.s32.totalorder %s111, %s114
    %p123 = scmp.eq.s32.totalorder %s17, 1
    %p124 = por %p122, %p123
    %p125 = scmp.ne.s32.totalorder %s114, %s115
    %p126 = scmp.eq.s32.totalorder %s17, 0
    %p127 = por %p125, %p126
    %p128 = scmp.ne.s32.totalorder %s114, %s115
    %p129 = scmp.eq.s32.totalorder %s18, 1
    %p130 = por %p128, %p129
    %p132 = scmp.ne.s32.totalorder %s115, %s131
    %p133 = scmp.eq.s32.totalorder %s18, 0
    %p134 = por %p132, %p133
    %s135 = ssub.s32 %s12, %s19
    %p136 = scmp.eq.s32.totalorder %s135, 0
    %s138 = sadd.s32 %s137, 1
    %s139 = scalar_select %p136, %s137, %s138
    %p142 = pneg %p136
    %p143 = scmp.eq.s32.totalorder %s12, 1
    %p144 = por %p142, %p143
    %p145 = scmp.ne.s32.totalorder %s137, %s140
    %p146 = scmp.eq.s32.totalorder %s12, 0
    %p147 = por %p145, %p146
    %p148 = scmp.ne.s32.totalorder %s137, %s140
    %p149 = scmp.eq.s32.totalorder %s17, 1
    %p150 = por %p148, %p149
    %p151 = scmp.ne.s32.totalorder %s140, %s141
    %p152 = scmp.eq.s32.totalorder %s17, 0
    %p153 = por %p151, %p152
    %p154 = scmp.ne.s32.totalorder %s140, %s141
    %p155 = scmp.eq.s32.totalorder %s18, 1
    %p156 = por %p154, %p155
    %p158 = scmp.ne.s32.totalorder %s141, %s157
    %p159 = scmp.eq.s32.totalorder %s18, 0
    %p160 = por %p158, %p159
    %p161 = scmp.le.s32.totalorder 1, %s12
    %p162 = scmp.lt.s32.totalorder %s12, 3
    %p163 = pnand %p161, %p162
    %p164 = pneg %p163
    // Predicated region
    $region9: #{tun_bone_forward.4} parent=5 // pred_check
      _
    $region10: #{tun_bone_forward.4} parent=5 // pred_check_branch
      %166 = sbr.rel (%p163) target = $region12
    $region11: #{tun_bone_forward.4} parent=5 // pred_region
      %s167 = ssub.s32 %s12, 1
      // Predicated region
      $region13: #{tun_bone_forward.4} parent=11 // pred_check
        %p168 = pneg %p59
      $region14: #{tun_bone_forward.4} parent=11 // pred_check_branch
        %170 = sbr.rel (%p168) target = $region16
      $region15: #{tun_bone_forward.4} parent=11 // pred_region
        _
      $region16: #{tun_bone_forward.4} parent=11 // pred_fallthru
        _
      // Predicated region
      $region17: #{tun_bone_forward.4} parent=11 // pred_check
        %p171 = pneg %p80
      $region18: #{tun_bone_forward.4} parent=11 // pred_check_branch
        %173 = sbr.rel (%p171) target = $region20
      $region19: #{tun_bone_forward.4} parent=11 // pred_region
        _
      $region20: #{tun_bone_forward.4} parent=11 // pred_fallthru
        _
      // Predicated region
      $region21: #{tun_bone_forward.4} parent=11 // pred_check
        %p174 = pneg %p101
      $region22: #{tun_bone_forward.4} parent=11 // pred_check_branch
        %176 = sbr.rel (%p174) target = $region24
      $region23: #{tun_bone_forward.4} parent=11 // pred_region
        _
      $region24: #{tun_bone_forward.4} parent=11 // pred_fallthru
        _
    $region12: #{tun_bone_forward.4} parent=5 // pred_fallthru
      _
    %p177 = scmp.lt.s32.totalorder %s12, 2
    // Predicated region
    $region25: #{tun_bone_forward.4} parent=5 // pred_check
      %p178 = pneg %p177
    $region26: #{tun_bone_forward.4} parent=5 // pred_check_branch
      %180 = sbr.rel (%p178) target = $region28
    $region27: #{tun_bone_forward.4} parent=5 // pred_region
      // Predicated region
      $region29: #{tun_bone_forward.4} parent=27 // pred_check
        %p181 = pneg %p32
      $region30: #{tun_bone_forward.4} parent=27 // pred_check_branch
        %183 = sbr.rel (%p181) target = $region32
      $region31: #{tun_bone_forward.4} parent=27 // pred_region
        %s184 = smul.u32 8, %s12
        %p185 = scmp.lt.s32.totalorder %s184, 15
        %s186 = scalar_select %p185, %s184, 15
        %s187 = smul.addr %s186, 8
        %s188 = scalar_lea.vmem %s0, %s187
        %s189 = smul.u32 8, %s12
      $region32: #{tun_bone_forward.4} parent=27 // pred_fallthru
        _
    $region28: #{tun_bone_forward.4} parent=5 // pred_fallthru
      _
    %p190 = scmp.le.s32.totalorder 1, %s12
    %p191 = scmp.lt.s32.totalorder %s12, 3
    %p192 = pnand %p190, %p191
    %p193 = pneg %p192
    // Predicated region
    $region33: #{tun_bone_forward.4} parent=5 // pred_check
      _
    $region34: #{tun_bone_forward.4} parent=5 // pred_check_branch
      %195 = sbr.rel (%p192) target = $region36
    $region35: #{tun_bone_forward.4} parent=5 // pred_region
      %s196 = ssub.s32 %s12, 1
      %s197 = smul.u32 8, %s17
      %p198 = scmp.lt.s32.totalorder %s197, 15
      %s199 = scalar_select %p198, %s197, 15
      %s200 = smul.addr %s199, 8
      %s201 = scalar_lea.vmem %s0, %s200
      %p202 = pneg %p38
      %p203 = pneg %p35
      %p204 = pneg %p59
      %p205 = pneg %p56
      %p206 = pneg %p80
      %p207 = pneg %p77
      %p208 = pneg %p101
      %p209 = pneg %p98
      %p210 = pneg %p127
      %p211 = pneg %p124
      %s212 = smul.u32 8, %s17
      %p213 = scmp.lt.s32.totalorder %s212, 15
      %s214 = scalar_select %p213, %s212, 15
      %s215 = smul.addr %s214, 4
      %s216 = scalar_lea.vmem %s4, %s215
      %p217 = pneg %p153
      %p218 = pneg %p150
      %s219 = smul.u32 8, %s17
      %p220 = scmp.lt.s32.totalorder %s219, 15
      %s221 = scalar_select %p220, %s219, 15
      %s222 = smul.addr %s221, 4
      %s223 = scalar_lea.vmem %s5, %s222
      %s224 = smul.u32 8, %s17
      %p225 = scmp.lt.s32.totalorder %s224, 15
      %s226 = scalar_select %p225, %s224, 15
      %s227 = smul.addr %s226, 8
      %s228 = scalar_lea.vmem %s0, %s227
      %s229 = smul.u32 8, %s17
      %s230 = smul.u32 8, %s17
      %p231 = scmp.lt.s32.totalorder %s230, 15
      %s232 = scalar_select %p231, %s230, 15
      %s233 = smul.addr %s232, 4
      %s234 = scalar_lea.vmem %s4, %s233
      %s235 = smul.u32 8, %s17
      %s236 = smul.u32 8, %s17
      %p237 = scmp.lt.s32.totalorder %s236, 15
      %s238 = scalar_select %p237, %s236, 15
      %s239 = smul.addr %s238, 4
      %s240 = scalar_lea.vmem %s5, %s239
      %s241 = smul.u32 8, %s17
      %v243 = vld [vmem:[%s228] sm:$0xff]
      %v244 = vld [vmem:[%s228 + $0x8] sm:$0xff]
      %v245 = vld [vmem:[%s228 + $0x10] sm:$0xff]
      %v246 = vld [vmem:[%s228 + $0x18] sm:$0xff]
      %v247 = vld [vmem:[%s228 + $0x20] sm:$0xff]
      %v248 = vld [vmem:[%s228 + $0x28] sm:$0xff]
      %v249 = vld [vmem:[%s228 + $0x30] sm:$0xff]
      %v250 = vld [vmem:[%s228 + $0x38] sm:$0xff]
      %v251 = vld [vmem:[%s1] sm:$0x7]
      %253 = vset.pattern.permute.xlu0 0
      %254 = vperm.xlu0 %253, %v243
      %v255 = vpop.permute.xlu0 %254
      %258 = vset.pattern.permute.xlu0 0
      %259 = vperm.xlu0 %258, %v244
      %v260 = vpop.permute.xlu0 %259
      %263 = vset.pattern.permute.xlu0 0
      %264 = vperm.xlu0 %263, %v245
      %v265 = vpop.permute.xlu0 %264
      %268 = vset.pattern.permute.xlu0 0
      %269 = vperm.xlu0 %268, %v246
      %v270 = vpop.permute.xlu0 %269
      %273 = vset.pattern.permute.xlu0 0
      %274 = vperm.xlu0 %273, %v247
      %v275 = vpop.permute.xlu0 %274
      %278 = vset.pattern.permute.xlu0 0
      %279 = vperm.xlu0 %278, %v248
      %v280 = vpop.permute.xlu0 %279
      %283 = vset.pattern.permute.xlu0 0
      %284 = vperm.xlu0 %283, %v249
      %v285 = vpop.permute.xlu0 %284
      %288 = vset.pattern.permute.xlu0 0
      %289 = vperm.xlu0 %288, %v250
      %v290 = vpop.permute.xlu0 %289
      %v292 = vperm.slane %v251, 0
      %v293 = vmul.f32 %v255, %v292
      %v294 = vmul.f32 %v260, %v292
      %v295 = vmul.f32 %v265, %v292
      %v296 = vmul.f32 %v270, %v292
      %v297 = vmul.f32 %v275, %v292
      %v298 = vmul.f32 %v280, %v292
      %v299 = vmul.f32 %v285, %v292
      %v300 = vmul.f32 %v290, %v292
      %301 = vset.pattern.permute.xlu0 1
      %302 = vperm.xlu0 %301, %v243
      %v303 = vpop.permute.xlu0 %302
      %305 = vset.pattern.permute.xlu0 1
      %306 = vperm.xlu0 %305, %v244
      %v307 = vpop.permute.xlu0 %306
      %309 = vset.pattern.permute.xlu0 1
      %310 = vperm.xlu0 %309, %v245
      %v311 = vpop.permute.xlu0 %310
      %313 = vset.pattern.permute.xlu0 1
      %314 = vperm.xlu0 %313, %v246
      %v315 = vpop.permute.xlu0 %314
      %317 = vset.pattern.permute.xlu0 1
      %318 = vperm.xlu0 %317, %v247
      %v319 = vpop.permute.xlu0 %318
      %321 = vset.pattern.permute.xlu0 1
      %322 = vperm.xlu0 %321, %v248
      %v323 = vpop.permute.xlu0 %322
      %325 = vset.pattern.permute.xlu0 1
      %326 = vperm.xlu0 %325, %v249
      %v327 = vpop.permute.xlu0 %326
      %329 = vset.pattern.permute.xlu0 1
      %330 = vperm.xlu0 %329, %v250
      %v331 = vpop.permute.xlu0 %330
      %v333 = vperm.slane %v251, 1
      %v334 = vmul.f32 %v303, %v333
      %v335 = vmul.f32 %v307, %v333
      %v336 = vmul.f32 %v311, %v333
      %v337 = vmul.f32 %v315, %v333
      %v338 = vmul.f32 %v319, %v333
      %v339 = vmul.f32 %v323, %v333
      %v340 = vmul.f32 %v327, %v333
      %v341 = vmul.f32 %v331, %v333
      %v342 = vadd.f32 %v293, %v334
      %v343 = vadd.f32 %v294, %v335
      %v344 = vadd.f32 %v295, %v336
      %v345 = vadd.f32 %v296, %v337
      %v346 = vadd.f32 %v297, %v338
      %v347 = vadd.f32 %v298, %v339
      %v348 = vadd.f32 %v299, %v340
      %v349 = vadd.f32 %v300, %v341
      %350 = vset.pattern.permute.xlu0 2
      %351 = vperm.xlu0 %350, %v243
      %v352 = vpop.permute.xlu0 %351
      %354 = vset.pattern.permute.xlu0 2
      %355 = vperm.xlu0 %354, %v244
      %v356 = vpop.permute.xlu0 %355
      %358 = vset.pattern.permute.xlu0 2
      %359 = vperm.xlu0 %358, %v245
      %v360 = vpop.permute.xlu0 %359
      %362 = vset.pattern.permute.xlu0 2
      %363 = vperm.xlu0 %362, %v246
      %v364 = vpop.permute.xlu0 %363
      %366 = vset.pattern.permute.xlu0 2
      %367 = vperm.xlu0 %366, %v247
      %v368 = vpop.permute.xlu0 %367
      %370 = vset.pattern.permute.xlu0 2
      %371 = vperm.xlu0 %370, %v248
      %v372 = vpop.permute.xlu0 %371
      %374 = vset.pattern.permute.xlu0 2
      %375 = vperm.xlu0 %374, %v249
      %v376 = vpop.permute.xlu0 %375
      %378 = vset.pattern.permute.xlu0 2
      %379 = vperm.xlu0 %378, %v250
      %v380 = vpop.permute.xlu0 %379
      %v382 = vperm.slane %v251, 2
      %v383 = vmul.f32 %v352, %v382
      %v384 = vmul.f32 %v356, %v382
      %v385 = vmul.f32 %v360, %v382
      %v386 = vmul.f32 %v364, %v382
      %v387 = vmul.f32 %v368, %v382
      %v388 = vmul.f32 %v372, %v382
      %v389 = vmul.f32 %v376, %v382
      %v390 = vmul.f32 %v380, %v382
      %v391 = vadd.f32 %v342, %v383
      %v392 = vadd.f32 %v343, %v384
      %v393 = vadd.f32 %v344, %v385
      %v394 = vadd.f32 %v345, %v386
      %v395 = vadd.f32 %v346, %v387
      %v396 = vadd.f32 %v347, %v388
      %v397 = vadd.f32 %v348, %v389
      %v398 = vadd.f32 %v349, %v390
      %v399 = vmax.f32 %v391, 0.0
      %v400 = vmax.f32 %v392, 0.0
      %v401 = vmax.f32 %v393, 0.0
      %v402 = vmax.f32 %v394, 0.0
      %v403 = vmax.f32 %v395, 0.0
      %v404 = vmax.f32 %v396, 0.0
      %v405 = vmax.f32 %v397, 0.0
      %v406 = vmax.f32 %v398, 0.0
      %v407 = vpack.c.bf16 %v400, %v399
      %v408 = vpack.c.bf16 %v402, %v401
      %v409 = vpack.c.bf16 %v404, %v403
      %v410 = vpack.c.bf16 %v406, %v405
      %v411 = vld [vmem:[%s2] sm:$0xf]
      %v412 = vld [vmem:[%s2 + $0x4] sm:$0xf]
      %v415 = vunpack.c.l.b16 %v411
      %v416 = vunpack.c.l.b16 %v412
      %v417 = vpack.c.b16 %v416, %v415
      %vm419 = vcmask 130048
      %v421 = vsel %vm419, %v407, 0
      %v424 = vsel %vm419, %v408, 0
      %v427 = vsel %vm419, %v409, 0
      %v430 = vsel %vm419, %v410, 0
      %432 = vmatpush.bf16.msra.mxu0 0
      %433 = vmatpush.bf16.msra.mxu0 0
      %434 = vmatpush.bf16.msra.mxu0 0
      %435 = vmatpush.bf16.msra.mxu0 0
      %436 = vmatpush.bf16.msra.mxu0 0
      %437 = vmatpush.bf16.msra.mxu0 0
      %438 = vmatpush.bf16.msra.mxu0 0
      %439 = vmatpush.bf16.msra.mxu0 %v417
      %440 = vmatmul.bf16.gmra.mxu0 %v421
      %v441 = vpop.f32.mrf.mxu0
      %v442 = vadd.f32 0.0, %v441
      %v443 = vpop.f32.mrf.mxu0
      %v444 = vadd.f32 0.0, %v443
      %445 = vmatmul.bf16.gmra.mxu0 %v424
      %v446 = vpop.f32.mrf.mxu0
      %v447 = vadd.f32 0.0, %v446
      %v448 = vpop.f32.mrf.mxu0
      %v449 = vadd.f32 0.0, %v448
      %450 = vmatmul.bf16.gmra.mxu0 %v427
      %v451 = vpop.f32.mrf.mxu0
      %v452 = vadd.f32 0.0, %v451
      %v453 = vpop.f32.mrf.mxu0
      %v454 = vadd.f32 0.0, %v453
      %455 = vmatmul.bf16.gmra.mxu0 %v430
      %v456 = vpop.f32.mrf.mxu0
      %v457 = vadd.f32 0.0, %v456
      %v458 = vpop.f32.mrf.mxu0
      %v459 = vadd.f32 0.0, %v458
      %460 = vdwg.mxu0
      %v461 = vmax.f32 %v442, 0.0
      %v462 = vmax.f32 %v444, 0.0
      %v463 = vmax.f32 %v447, 0.0
      %v464 = vmax.f32 %v449, 0.0
      %v465 = vmax.f32 %v452, 0.0
      %v466 = vmax.f32 %v454, 0.0
      %v467 = vmax.f32 %v457, 0.0
      %v468 = vmax.f32 %v459, 0.0
      %v469 = vpack.c.bf16 %v461, %v461
      %v470 = vpack.c.bf16 %v462, %v462
      %v471 = vpack.c.bf16 %v463, %v463
      %v472 = vpack.c.bf16 %v464, %v464
      %v473 = vpack.c.bf16 %v465, %v465
      %v474 = vpack.c.bf16 %v466, %v466
      %v475 = vpack.c.bf16 %v467, %v467
      %v476 = vpack.c.bf16 %v468, %v468
      %vm477 = vcmask 257024
      %478 = vst.msk [vmem:[%s234] sm:$0xf] %vm477, %v469
      %479 = vst.msk [vmem:[%s234 + $0x4] sm:$0xf] %vm477, %v470
      %480 = vst.msk [vmem:[%s234 + $0x8] sm:$0xf] %vm477, %v471
      %481 = vst.msk [vmem:[%s234 + $0xc] sm:$0xf] %vm477, %v472
      %482 = vst.msk [vmem:[%s234 + $0x10] sm:$0xf] %vm477, %v473
      %483 = vst.msk [vmem:[%s234 + $0x14] sm:$0xf] %vm477, %v474
      %484 = vst.msk [vmem:[%s234 + $0x18] sm:$0xf] %vm477, %v475
      %485 = vst.msk [vmem:[%s234 + $0x1c] sm:$0xf] %vm477, %v476
      %v486 = vld [vmem:[%s3] sm:$0xf]
      %v487 = vld [vmem:[%s3 + $0x4] sm:$0xf]
      %v488 = vld [vmem:[%s3 + $0x8] sm:$0xf]
      %v489 = vld [vmem:[%s3 + $0xc] sm:$0xf]
      %v498 = vunpack.c.l.b16 %v469
      %v499 = vunpack.c.l.b16 %v470
      %v500 = vunpack.c.l.b16 %v471
      %v501 = vunpack.c.l.b16 %v472
      %v502 = vunpack.c.l.b16 %v473
      %v503 = vunpack.c.l.b16 %v474
      %v504 = vunpack.c.l.b16 %v475
      %v505 = vunpack.c.l.b16 %v476
      %v506 = vpack.c.b16 %v499, %v498
      %v507 = vpack.c.b16 %v501, %v500
      %v508 = vpack.c.b16 %v503, %v502
      %v509 = vpack.c.b16 %v505, %v504
      %v514 = vunpack.c.l.b16 %v486
      %v515 = vunpack.c.l.b16 %v487
      %v516 = vunpack.c.l.b16 %v488
      %v517 = vunpack.c.l.b16 %v489
      %v518 = vpack.c.b16 %v515, %v514
      %v519 = vpack.c.b16 %v517, %v516
      %vm522 = vcmask 261120
      %v524 = vsel %vm522, %v506, 0
      %v527 = vsel %vm522, %v507, 0
      %v530 = vsel %vm522, %v508, 0
      %v533 = vsel %vm522, %v509, 0
      %535 = vmatpush.bf16.msra.mxu0 0
      %536 = vmatpush.bf16.msra.mxu0 0
      %537 = vmatpush.bf16.msra.mxu0 0
      %538 = vmatpush.bf16.msra.mxu0 0
      %539 = vmatpush.bf16.msra.mxu0 0
      %540 = vmatpush.bf16.msra.mxu0 0
      %541 = vmatpush.bf16.msra.mxu0 %v519
      %542 = vmatpush.bf16.msra.mxu0 %v518
      %543 = vmatmul.bf16.gmra.mxu0 %v524
      %v544 = vpop.f32.mrf.mxu0
      %v545 = vadd.f32 0.0, %v544
      %v546 = vpop.f32.mrf.mxu0
      %v547 = vadd.f32 0.0, %v546
      %548 = vmatmul.bf16.gmra.mxu0 %v527
      %v549 = vpop.f32.mrf.mxu0
      %v550 = vadd.f32 0.0, %v549
      %v551 = vpop.f32.mrf.mxu0
      %v552 = vadd.f32 0.0, %v551
      %553 = vmatmul.bf16.gmra.mxu0 %v530
      %v554 = vpop.f32.mrf.mxu0
      %v555 = vadd.f32 0.0, %v554
      %v556 = vpop.f32.mrf.mxu0
      %v557 = vadd.f32 0.0, %v556
      %558 = vmatmul.bf16.gmra.mxu0 %v533
      %v559 = vpop.f32.mrf.mxu0
      %v560 = vadd.f32 0.0, %v559
      %v561 = vpop.f32.mrf.mxu0
      %v562 = vadd.f32 0.0, %v561
      %563 = vdwg.mxu0
      %v564 = vpack.c.bf16 %v545, %v545
      %v565 = vpack.c.bf16 %v547, %v547
      %v566 = vpack.c.bf16 %v550, %v550
      %v567 = vpack.c.bf16 %v552, %v552
      %v568 = vpack.c.bf16 %v555, %v555
      %v569 = vpack.c.bf16 %v557, %v557
      %v570 = vpack.c.bf16 %v560, %v560
      %v571 = vpack.c.bf16 %v562, %v562
      %572 = vst [vmem:[%s240] sm:$0xf] %v564
      %573 = vst [vmem:[%s240 + $0x4] sm:$0xf] %v565
      %574 = vst [vmem:[%s240 + $0x8] sm:$0xf] %v566
      %575 = vst [vmem:[%s240 + $0xc] sm:$0xf] %v567
      %576 = vst [vmem:[%s240 + $0x10] sm:$0xf] %v568
      %577 = vst [vmem:[%s240 + $0x14] sm:$0xf] %v569
      %578 = vst [vmem:[%s240 + $0x18] sm:$0xf] %v570
      %579 = vst [vmem:[%s240 + $0x1c] sm:$0xf] %v571
      %s580 = smul.u32 8, %s17
      %p581 = scmp.lt.s32.totalorder %s580, 15
      %s582 = scalar_select %p581, %s580, 15
      %s583 = smul.addr %s582, 4
      %s584 = scalar_lea.vmem %s4, %s583
      %s585 = smul.u32 8, %s17
      %p586 = scmp.lt.s32.totalorder %s585, 15
      %s587 = scalar_select %p586, %s585, 15
      %s588 = smul.addr %s587, 4
      %s589 = scalar_lea.vmem %s5, %s588
      // Predicated region
      $region37: #{tun_bone_forward.4} parent=35 // pred_check
        %p590 = pneg %p124
      $region38: #{tun_bone_forward.4} parent=35 // pred_check_branch
        %592 = sbr.rel (%p590) target = $region40
      $region39: #{tun_bone_forward.4} parent=35 // pred_region
        %s593 = smul.u32 8, %s17
      $region40: #{tun_bone_forward.4} parent=35 // pred_fallthru
        _
      // Predicated region
      $region41: #{tun_bone_forward.4} parent=35 // pred_check
        %p594 = pneg %p150
      $region42: #{tun_bone_forward.4} parent=35 // pred_check_branch
        %596 = sbr.rel (%p594) target = $region44
      $region43: #{tun_bone_forward.4} parent=35 // pred_region
        %s597 = smul.u32 8, %s17
      $region44: #{tun_bone_forward.4} parent=35 // pred_fallthru
        _
    $region36: #{tun_bone_forward.4} parent=5 // pred_fallthru
      _
    %p598 = scmp.le.s32.totalorder 2, %s12
    // Predicated region
    $region45: #{tun_bone_forward.4} parent=5 // pred_check
      %p599 = pneg %p598
    $region46: #{tun_bone_forward.4} parent=5 // pred_check_branch
      %601 = sbr.rel (%p599) target = $region48
    $region47: #{tun_bone_forward.4} parent=5 // pred_region
      %s602 = ssub.s32 %s12, 2
      // Predicated region
      $region49: #{tun_bone_forward.4} parent=47 // pred_check
        %p603 = pneg %p130
      $region50: #{tun_bone_forward.4} parent=47 // pred_check_branch
        %605 = sbr.rel (%p603) target = $region52
      $region51: #{tun_bone_forward.4} parent=47 // pred_region
        %s606 = smul.u32 8, %s18
        %p607 = scmp.lt.s32.totalorder %s606, 15
        %s608 = scalar_select %p607, %s606, 15
        %s609 = smul.addr %s608, 4
        %s610 = scalar_lea.vmem %s4, %s609
      $region52: #{tun_bone_forward.4} parent=47 // pred_fallthru
        _
      // Predicated region
      $region53: #{tun_bone_forward.4} parent=47 // pred_check
        %p611 = pneg %p156
      $region54: #{tun_bone_forward.4} parent=47 // pred_check_branch
        %613 = sbr.rel (%p611) target = $region56
      $region55: #{tun_bone_forward.4} parent=47 // pred_region
        %s614 = smul.u32 8, %s18
        %p615 = scmp.lt.s32.totalorder %s614, 15
        %s616 = scalar_select %p615, %s614, 15
        %s617 = smul.addr %s616, 4
        %s618 = scalar_lea.vmem %s5, %s617
      $region56: #{tun_bone_forward.4} parent=47 // pred_fallthru
        _
    $region48: #{tun_bone_forward.4} parent=5 // pred_fallthru
      _
  $region6: #{tun_bone_forward.4} parent=0 // loop_footer
    %s16 = sadd.s32 1, %s12
  $region7: #{tun_bone_forward.4} parent=0 // loop_footer_branch
    %11 = sbr.rel target = $region3
  $region8: #{tun_bone_forward.4} parent=0 // loop_exit
    _

// kernel: tun_bone_forward.7
$region0: #{tun_bone_forward.7}
  #allocation0 [shape = 'u32[]', space=smem, size = 0x4, offset = 0x4, fixed_abs, tag = 'smem constant byte address 0x4 - core index']
  #allocation1 [shape = 'u32[72,128]{1,0:T(1,128)}', space=vmem, size = 0x9000, scoped, tag = 'internal scratch']
  %s0 = inlined_call_operand.vmem [shape: bf16[128,32], index: 0, kind: input, shape index: {}]
  %s1 = inlined_call_operand.vmem [shape: bf16[128,128], index: 1, kind: input, shape index: {}]
  %s2 = inlined_call_operand.vmem [shape: bf16[32,64], index: 2, kind: input, shape index: {}]
  %s3 = inlined_call_operand.vmem [shape: bf16[128,64], index: 3, kind: input, shape index: {}]
  %s4 = inlined_call_operand.vmem [shape: bf16[64,128], index: 4, kind: input, shape index: {}]
  %s5 = inlined_call_operand.vmem [shape: bf16[128,128], index: 5, kind: output, shape index: {}]
  %s6 = sld [smem:[#allocation0]]
  $region53: #{tun_bone_forward.7} parent=0
    _
  %s8 = ssub.s32 1, %s6
  %s9 = scalar_select 0, %s8, %s6
  loop: start=0, step=1, limit=4
  $region2: #{tun_bone_forward.7} parent=0 // loop_pre_header
    _
  $region3: #{tun_bone_forward.7} parent=0 // loop_header
    %s11 = sphi 0, %s15
    %p12 = scmp.ge.s32.totalorder %s11, 4
    %s21 = sphi 0, %s23
    %s24 = sphi 0, %s21
    %s25 = sphi 0, %s24
    %s41 = sphi 0, %s25
    %s47 = sphi 0, %s49
    %s50 = sphi 0, %s47
    %s51 = sphi 0, %s50
    %s67 = sphi 0, %s51
    %s71 = sphi 0, %s71
    %s73 = sphi 0, %s71
    %s74 = sphi 0, %s73
    %s88 = sphi 0, %s74
    %s92 = sphi 0, %s92
    %s94 = sphi 0, %s92
    %s95 = sphi 0, %s94
    %s109 = sphi 0, %s95
    %s113 = sphi 0, %s113
    %s115 = sphi 0, %s113
    %s116 = sphi 0, %s115
    %s130 = sphi 0, %s116
    %s136 = sphi 0, %s138
    %s139 = sphi 0, %s136
    %s140 = sphi 0, %s139
    %s156 = sphi 0, %s140
  $region4: #{tun_bone_forward.7} parent=0 // loop_header_branch
    %14 = sbr.rel (%p12) target = $region8
  $region5: #{tun_bone_forward.7} parent=0 // loop_body
    %s16 = ssub.s32 %s11, 1
    %s17 = ssub.s32 %s11, 2
    %s18 = sadd.s32 %s11, 1
    %s19 = ssub.s32 %s11, %s18
    %p20 = scmp.eq.s32.totalorder %s19, 0
    %s22 = sadd.s32 %s21, 1
    %s23 = scalar_select %p20, %s21, %s22
    %p26 = pneg %p20
    %p27 = scmp.eq.s32.totalorder %s11, 1
    %p28 = por %p26, %p27
    %p29 = scmp.ne.s32.totalorder %s21, %s24
    %p30 = scmp.eq.s32.totalorder %s11, 0
    %p31 = por %p29, %p30
    %p32 = scmp.ne.s32.totalorder %s21, %s24
    %p33 = scmp.eq.s32.totalorder %s16, 1
    %p34 = por %p32, %p33
    %p35 = scmp.ne.s32.totalorder %s24, %s25
    %p36 = scmp.eq.s32.totalorder %s16, 0
    %p37 = por %p35, %p36
    %p38 = scmp.ne.s32.totalorder %s24, %s25
    %p39 = scmp.eq.s32.totalorder %s17, 1
    %p40 = por %p38, %p39
    %p42 = scmp.ne.s32.totalorder %s25, %s41
    %p43 = scmp.eq.s32.totalorder %s17, 0
    %p44 = por %p42, %p43
    %s45 = ssub.s32 %s11, %s18
    %p46 = scmp.eq.s32.totalorder %s45, 0
    %s48 = sadd.s32 %s47, 1
    %s49 = scalar_select %p46, %s47, %s48
    %p52 = pneg %p46
    %p53 = scmp.eq.s32.totalorder %s11, 1
    %p54 = por %p52, %p53
    %p55 = scmp.ne.s32.totalorder %s47, %s50
    %p56 = scmp.eq.s32.totalorder %s11, 0
    %p57 = por %p55, %p56
    %p58 = scmp.ne.s32.totalorder %s47, %s50
    %p59 = scmp.eq.s32.totalorder %s16, 1
    %p60 = por %p58, %p59
    %p61 = scmp.ne.s32.totalorder %s50, %s51
    %p62 = scmp.eq.s32.totalorder %s16, 0
    %p63 = por %p61, %p62
    %p64 = scmp.ne.s32.totalorder %s50, %s51
    %p65 = scmp.eq.s32.totalorder %s17, 1
    %p66 = por %p64, %p65
    %p68 = scmp.ne.s32.totalorder %s51, %s67
    %p69 = scmp.eq.s32.totalorder %s17, 0
    %p70 = por %p68, %p69
    %s72 = sadd.s32 %s71, 1
    %p75 = scmp.eq.s32.totalorder %s11, 1
    %p76 = scmp.ne.s32.totalorder %s71, %s73
    %p77 = scmp.eq.s32.totalorder %s11, 0
    %p78 = por %p76, %p77
    %p79 = scmp.ne.s32.totalorder %s71, %s73
    %p80 = scmp.eq.s32.totalorder %s16, 1
    %p81 = por %p79, %p80
    %p82 = scmp.ne.s32.totalorder %s73, %s74
    %p83 = scmp.eq.s32.totalorder %s16, 0
    %p84 = por %p82, %p83
    %p85 = scmp.ne.s32.totalorder %s73, %s74
    %p86 = scmp.eq.s32.totalorder %s17, 1
    %p87 = por %p85, %p86
    %p89 = scmp.ne.s32.totalorder %s74, %s88
    %p90 = scmp.eq.s32.totalorder %s17, 0
    %p91 = por %p89, %p90
    %s93 = sadd.s32 %s92, 1
    %p96 = scmp.eq.s32.totalorder %s11, 1
    %p97 = scmp.ne.s32.totalorder %s92, %s94
    %p98 = scmp.eq.s32.totalorder %s11, 0
    %p99 = por %p97, %p98
    %p100 = scmp.ne.s32.totalorder %s92, %s94
    %p101 = scmp.eq.s32.totalorder %s16, 1
    %p102 = por %p100, %p101
    %p103 = scmp.ne.s32.totalorder %s94, %s95
    %p104 = scmp.eq.s32.totalorder %s16, 0
    %p105 = por %p103, %p104
    %p106 = scmp.ne.s32.totalorder %s94, %s95
    %p107 = scmp.eq.s32.totalorder %s17, 1
    %p108 = por %p106, %p107
    %p110 = scmp.ne.s32.totalorder %s95, %s109
    %p111 = scmp.eq.s32.totalorder %s17, 0
    %p112 = por %p110, %p111
    %s114 = sadd.s32 %s113, 1
    %p117 = scmp.eq.s32.totalorder %s11, 1
    %p118 = scmp.ne.s32.totalorder %s113, %s115
    %p119 = scmp.eq.s32.totalorder %s11, 0
    %p120 = por %p118, %p119
    %p121 = scmp.ne.s32.totalorder %s113, %s115
    %p122 = scmp.eq.s32.totalorder %s16, 1
    %p123 = por %p121, %p122
    %p124 = scmp.ne.s32.totalorder %s115, %s116
    %p125 = scmp.eq.s32.totalorder %s16, 0
    %p126 = por %p124, %p125
    %p127 = scmp.ne.s32.totalorder %s115, %s116
    %p128 = scmp.eq.s32.totalorder %s17, 1
    %p129 = por %p127, %p128
    %p131 = scmp.ne.s32.totalorder %s116, %s130
    %p132 = scmp.eq.s32.totalorder %s17, 0
    %p133 = por %p131, %p132
    %s134 = ssub.s32 %s11, %s18
    %p135 = scmp.eq.s32.totalorder %s134, 0
    %s137 = sadd.s32 %s136, 1
    %s138 = scalar_select %p135, %s136, %s137
    %p141 = pneg %p135
    %p142 = scmp.eq.s32.totalorder %s11, 1
    %p143 = por %p141, %p142
    %p144 = scmp.ne.s32.totalorder %s136, %s139
    %p145 = scmp.eq.s32.totalorder %s11, 0
    %p146 = por %p144, %p145
    %p147 = scmp.ne.s32.totalorder %s136, %s139
    %p148 = scmp.eq.s32.totalorder %s16, 1
    %p149 = por %p147, %p148
    %p150 = scmp.ne.s32.totalorder %s139, %s140
    %p151 = scmp.eq.s32.totalorder %s16, 0
    %p152 = por %p150, %p151
    %p153 = scmp.ne.s32.totalorder %s139, %s140
    %p154 = scmp.eq.s32.totalorder %s17, 1
    %p155 = por %p153, %p154
    %p157 = scmp.ne.s32.totalorder %s140, %s156
    %p158 = scmp.eq.s32.totalorder %s17, 0
    %p159 = por %p157, %p158
    %p160 = scmp.le.s32.totalorder 1, %s11
    %p161 = scmp.lt.s32.totalorder %s11, 3
    %p162 = pnand %p160, %p161
    %p163 = pneg %p162
    // Predicated region
    $region9: #{tun_bone_forward.7} parent=5 // pred_check
      _
    $region10: #{tun_bone_forward.7} parent=5 // pred_check_branch
      %165 = sbr.rel (%p162) target = $region12
    $region11: #{tun_bone_forward.7} parent=5 // pred_region
      %s166 = ssub.s32 %s11, 1
      // Predicated region
      $region13: #{tun_bone_forward.7} parent=11 // pred_check
        %p167 = pneg %p84
      $region14: #{tun_bone_forward.7} parent=11 // pred_check_branch
        %169 = sbr.rel (%p167) target = $region16
      $region15: #{tun_bone_forward.7} parent=11 // pred_region
        _
      $region16: #{tun_bone_forward.7} parent=11 // pred_fallthru
        _
      // Predicated region
      $region17: #{tun_bone_forward.7} parent=11 // pred_check
        %p170 = pneg %p105
      $region18: #{tun_bone_forward.7} parent=11 // pred_check_branch
        %172 = sbr.rel (%p170) target = $region20
      $region19: #{tun_bone_forward.7} parent=11 // pred_region
        _
      $region20: #{tun_bone_forward.7} parent=11 // pred_fallthru
        _
      // Predicated region
      $region21: #{tun_bone_forward.7} parent=11 // pred_check
        %p173 = pneg %p126
      $region22: #{tun_bone_forward.7} parent=11 // pred_check_branch
        %175 = sbr.rel (%p173) target = $region24
      $region23: #{tun_bone_forward.7} parent=11 // pred_region
        _
      $region24: #{tun_bone_forward.7} parent=11 // pred_fallthru
        _
    $region12: #{tun_bone_forward.7} parent=5 // pred_fallthru
      _
    %p176 = scmp.lt.s32.totalorder %s11, 2
    // Predicated region
    $region25: #{tun_bone_forward.7} parent=5 // pred_check
      %p177 = pneg %p176
    $region26: #{tun_bone_forward.7} parent=5 // pred_check_branch
      %179 = sbr.rel (%p177) target = $region28
    $region27: #{tun_bone_forward.7} parent=5 // pred_region
      // Predicated region
      $region29: #{tun_bone_forward.7} parent=27 // pred_check
        %p180 = pneg %p31
      $region30: #{tun_bone_forward.7} parent=27 // pred_check_branch
        %182 = sbr.rel (%p180) target = $region32
      $region31: #{tun_bone_forward.7} parent=27 // pred_region
        %s183 = smul.u32 8, %s11
        %p184 = scmp.lt.s32.totalorder %s183, 15
        %s185 = scalar_select %p184, %s183, 15
        %s186 = smul.addr %s185, 4
        %s187 = scalar_lea.vmem %s0, %s186
        %s188 = smul.u32 8, %s11
      $region32: #{tun_bone_forward.7} parent=27 // pred_fallthru
        _
      // Predicated region
      $region33: #{tun_bone_forward.7} parent=27 // pred_check
        %p189 = pneg %p57
      $region34: #{tun_bone_forward.7} parent=27 // pred_check_branch
        %191 = sbr.rel (%p189) target = $region36
      $region35: #{tun_bone_forward.7} parent=27 // pred_region
        %s192 = smul.u32 8, %s11
        %p193 = scmp.lt.s32.totalorder %s192, 15
        %s194 = scalar_select %p193, %s192, 15
        %s195 = smul.addr %s194, 4
        %s196 = scalar_lea.vmem %s1, %s195
        %s197 = smul.u32 8, %s11
      $region36: #{tun_bone_forward.7} parent=27 // pred_fallthru
        _
    $region28: #{tun_bone_forward.7} parent=5 // pred_fallthru
      _
    %p198 = scmp.le.s32.totalorder 1, %s11
    %p199 = scmp.lt.s32.totalorder %s11, 3
    %p200 = pnand %p198, %p199
    %p201 = pneg %p200
    // Predicated region
    $region37: #{tun_bone_forward.7} parent=5 // pred_check
      _
    $region38: #{tun_bone_forward.7} parent=5 // pred_check_branch
      %203 = sbr.rel (%p200) target = $region40
    $region39: #{tun_bone_forward.7} parent=5 // pred_region
      %s204 = ssub.s32 %s11, 1
      %s205 = smul.u32 8, %s16
      %p206 = scmp.lt.s32.totalorder %s205, 15
      %s207 = scalar_select %p206, %s205, 15
      %s208 = smul.addr %s207, 4
      %s209 = scalar_lea.vmem %s0, %s208
      %p210 = pneg %p37
      %p211 = pneg %p34
      %s212 = smul.u32 8, %s16
      %p213 = scmp.lt.s32.totalorder %s212, 15
      %s214 = scalar_select %p213, %s212, 15
      %s215 = smul.addr %s214, 4
      %s216 = scalar_lea.vmem %s1, %s215
      %p217 = pneg %p63
      %p218 = pneg %p60
      %p219 = pneg %p84
      %p220 = pneg %p81
      %p221 = pneg %p105
      %p222 = pneg %p102
      %p223 = pneg %p126
      %p224 = pneg %p123
      %p225 = pneg %p152
      %p226 = pneg %p149
      %s227 = smul.u32 8, %s16
      %p228 = scmp.lt.s32.totalorder %s227, 15
      %s229 = scalar_select %p228, %s227, 15
      %s230 = smul.addr %s229, 4
      %s231 = scalar_lea.vmem %s5, %s230
      %s232 = smul.u32 8, %s16
      %p233 = scmp.lt.s32.totalorder %s232, 15
      %s234 = scalar_select %p233, %s232, 15
      %s235 = smul.addr %s234, 4
      %s236 = scalar_lea.vmem %s0, %s235
      %s237 = smul.u32 8, %s16
      %s238 = smul.u32 8, %s16
      %p239 = scmp.lt.s32.totalorder %s238, 15
      %s240 = scalar_select %p239, %s238, 15
      %s241 = smul.addr %s240, 4
      %s242 = scalar_lea.vmem %s1, %s241
      %s243 = smul.u32 8, %s16
      %s244 = smul.u32 8, %s16
      %p245 = scmp.lt.s32.totalorder %s244, 15
      %s246 = scalar_select %p245, %s244, 15
      %s247 = smul.addr %s246, 4
      %s248 = scalar_lea.vmem %s5, %s247
      %s249 = smul.u32 8, %s16
      %v251 = vld [vmem:[%s236] sm:$0xf]
      %v252 = vld [vmem:[%s236 + $0x4] sm:$0xf]
      %v253 = vld [vmem:[%s236 + $0x8] sm:$0xf]
      %v254 = vld [vmem:[%s236 + $0xc] sm:$0xf]
      %v255 = vld [vmem:[%s236 + $0x10] sm:$0xf]
      %v256 = vld [vmem:[%s236 + $0x14] sm:$0xf]
      %v257 = vld [vmem:[%s236 + $0x18] sm:$0xf]
      %v258 = vld [vmem:[%s236 + $0x1c] sm:$0xf]
      %v259 = vld [vmem:[%s2] sm:$0xf]
      %v260 = vld [vmem:[%s2 + $0x4] sm:$0xf]
      %v261 = vld [vmem:[%s2 + $0x8] sm:$0xf]
      %v262 = vld [vmem:[%s2 + $0xc] sm:$0xf]
      %v263 = vld [vmem:[%s242] sm:$0xf]
      %v264 = vld [vmem:[%s242 + $0x4] sm:$0xf]
      %v265 = vld [vmem:[%s242 + $0x8] sm:$0xf]
      %v266 = vld [vmem:[%s242 + $0xc] sm:$0xf]
      %v267 = vld [vmem:[%s242 + $0x10] sm:$0xf]
      %v268 = vld [vmem:[%s242 + $0x14] sm:$0xf]
      %v269 = vld [vmem:[%s242 + $0x18] sm:$0xf]
      %v270 = vld [vmem:[%s242 + $0x1c] sm:$0xf]
      %v271 = vld [vmem:[%s3] sm:$0xf]
      %v272 = vld [vmem:[%s3 + $0x4] sm:$0xf]
      %v273 = vld [vmem:[%s3 + $0x8] sm:$0xf]
      %v274 = vld [vmem:[%s3 + $0xc] sm:$0xf]
      %v275 = vld [vmem:[%s3 + $0x10] sm:$0xf]
      %v276 = vld [vmem:[%s3 + $0x14] sm:$0xf]
      %v277 = vld [vmem:[%s3 + $0x18] sm:$0xf]
      %v278 = vld [vmem:[%s3 + $0x1c] sm:$0xf]
      %v279 = vld [vmem:[%s3 + $0x20] sm:$0xf]
      %v280 = vld [vmem:[%s3 + $0x24] sm:$0xf]
      %v281 = vld [vmem:[%s3 + $0x28] sm:$0xf]
      %v282 = vld [vmem:[%s3 + $0x2c] sm:$0xf]
      %v283 = vld [vmem:[%s3 + $0x30] sm:$0xf]
      %v284 = vld [vmem:[%s3 + $0x34] sm:$0xf]
      %v285 = vld [vmem:[%s3 + $0x38] sm:$0xf]
      %v286 = vld [vmem:[%s3 + $0x3c] sm:$0xf]
      %v295 = vunpack.c.l.b16 %v263
      %v296 = vunpack.c.l.b16 %v264
      %v297 = vunpack.c.l.b16 %v265
      %v298 = vunpack.c.l.b16 %v266
      %v299 = vunpack.c.l.b16 %v267
      %v300 = vunpack.c.l.b16 %v268
      %v301 = vunpack.c.l.b16 %v269
      %v302 = vunpack.c.l.b16 %v270
      %v303 = vpack.c.b16 %v296, %v295
      %v304 = vpack.c.b16 %v298, %v297
      %v305 = vpack.c.b16 %v300, %v299
      %v306 = vpack.c.b16 %v302, %v301
      %v327 = vunpack.c.l.b16 %v271
      %v328 = vunpack.c.l.b16 %v272
      %v329 = vunpack.c.l.b16 %v273
      %v330 = vunpack.c.l.b16 %v274
      %v331 = vunpack.c.l.b16 %v275
      %v332 = vunpack.c.l.b16 %v276
      %v333 = vunpack.c.l.b16 %v277
      %v334 = vunpack.c.l.b16 %v278
      %v335 = vunpack.c.l.b16 %v279
      %v336 = vunpack.c.l.b16 %v280
      %v337 = vunpack.c.l.b16 %v281
      %v338 = vunpack.c.l.b16 %v282
      %v339 = vunpack.c.l.b16 %v283
      %v340 = vunpack.c.l.b16 %v284
      %v341 = vunpack.c.l.b16 %v285
      %v342 = vunpack.c.l.b16 %v286
      %v343 = vpack.c.b16 %v328, %v327
      %v344 = vpack.c.b16 %v330, %v329
      %v345 = vpack.c.b16 %v332, %v331
      %v346 = vpack.c.b16 %v334, %v333
      %v347 = vpack.c.b16 %v336, %v335
      %v348 = vpack.c.b16 %v338, %v337
      %v349 = vpack.c.b16 %v340, %v339
      %v350 = vpack.c.b16 %v342, %v341
      %359 = vmatpush.bf16.msra.mxu0 %v350
      %360 = vmatpush.bf16.msra.mxu0 %v349
      %361 = vmatpush.bf16.msra.mxu0 %v348
      %362 = vmatpush.bf16.msra.mxu0 %v347
      %363 = vmatpush.bf16.msra.mxu0 %v346
      %364 = vmatpush.bf16.msra.mxu0 %v345
      %365 = vmatpush.bf16.msra.mxu0 %v344
      %366 = vmatpush.bf16.msra.mxu0 %v343
      %367 = vmatmul.bf16.gmra.mxu0 %v303
      %v368 = vpop.f32.mrf.mxu0
      %v369 = vadd.f32 0.0, %v368
      %v370 = vpop.f32.mrf.mxu0
      %v371 = vadd.f32 0.0, %v370
      %372 = vmatmul.bf16.gmra.mxu0 %v304
      %v373 = vpop.f32.mrf.mxu0
      %v374 = vadd.f32 0.0, %v373
      %v375 = vpop.f32.mrf.mxu0
      %v376 = vadd.f32 0.0, %v375
      %377 = vmatmul.bf16.gmra.mxu0 %v305
      %v378 = vpop.f32.mrf.mxu0
      %v379 = vadd.f32 0.0, %v378
      %v380 = vpop.f32.mrf.mxu0
      %v381 = vadd.f32 0.0, %v380
      %382 = vmatmul.bf16.gmra.mxu0 %v306
      %v383 = vpop.f32.mrf.mxu0
      %v384 = vadd.f32 0.0, %v383
      %v385 = vpop.f32.mrf.mxu0
      %v386 = vadd.f32 0.0, %v385
      %387 = vdwg.mxu0
      %v396 = vunpack.c.l.b16 %v251
      %v397 = vunpack.c.l.b16 %v252
      %v398 = vunpack.c.l.b16 %v253
      %v399 = vunpack.c.l.b16 %v254
      %v400 = vunpack.c.l.b16 %v255
      %v401 = vunpack.c.l.b16 %v256
      %v402 = vunpack.c.l.b16 %v257
      %v403 = vunpack.c.l.b16 %v258
      %v404 = vpack.c.b16 %v397, %v396
      %v405 = vpack.c.b16 %v399, %v398
      %v406 = vpack.c.b16 %v401, %v400
      %v407 = vpack.c.b16 %v403, %v402
      %v412 = vunpack.c.l.b16 %v259
      %v413 = vunpack.c.l.b16 %v260
      %v414 = vunpack.c.l.b16 %v261
      %v415 = vunpack.c.l.b16 %v262
      %v416 = vpack.c.b16 %v413, %v412
      %v417 = vpack.c.b16 %v415, %v414
      %vm420 = vcmask 261120
      %v422 = vsel %vm420, %v404, 0
      %v425 = vsel %vm420, %v405, 0
      %v428 = vsel %vm420, %v406, 0
      %v431 = vsel %vm420, %v407, 0
      %433 = vmatpush.bf16.msra.mxu0 0
      %434 = vmatpush.bf16.msra.mxu0 0
      %435 = vmatpush.bf16.msra.mxu0 0
      %436 = vmatpush.bf16.msra.mxu0 0
      %437 = vmatpush.bf16.msra.mxu0 0
      %438 = vmatpush.bf16.msra.mxu0 0
      %439 = vmatpush.bf16.msra.mxu0 %v417
      %440 = vmatpush.bf16.msra.mxu0 %v416
      %441 = vmatmul.bf16.gmra.mxu0 %v422
      %v442 = vpop.f32.mrf.mxu0
      %v443 = vadd.f32 %v369, %v442
      %v444 = vpop.f32.mrf.mxu0
      %v445 = vadd.f32 %v371, %v444
      %446 = vmatmul.bf16.gmra.mxu0 %v425
      %v447 = vpop.f32.mrf.mxu0
      %v448 = vadd.f32 %v374, %v447
      %v449 = vpop.f32.mrf.mxu0
      %v450 = vadd.f32 %v376, %v449
      %451 = vmatmul.bf16.gmra.mxu0 %v428
      %v452 = vpop.f32.mrf.mxu0
      %v453 = vadd.f32 %v379, %v452
      %v454 = vpop.f32.mrf.mxu0
      %v455 = vadd.f32 %v381, %v454
      %456 = vmatmul.bf16.gmra.mxu0 %v431
      %v457 = vpop.f32.mrf.mxu0
      %v458 = vadd.f32 %v384, %v457
      %v459 = vpop.f32.mrf.mxu0
      %v460 = vadd.f32 %v386, %v459
      %461 = vdwg.mxu0
      %v462 = vmax.f32 %v443, 0.0
      %v463 = vmax.f32 %v445, 0.0
      %v464 = vmax.f32 %v448, 0.0
      %v465 = vmax.f32 %v450, 0.0
      %v466 = vmax.f32 %v453, 0.0
      %v467 = vmax.f32 %v455, 0.0
      %v468 = vmax.f32 %v458, 0.0
      %v469 = vmax.f32 %v460, 0.0
      %v470 = vpack.c.bf16 %v463, %v462
      %v471 = vpack.c.bf16 %v465, %v464
      %v472 = vpack.c.bf16 %v467, %v466
      %v473 = vpack.c.bf16 %v469, %v468
      %v474 = vld [vmem:[%s4] sm:$0xf]
      %v475 = vld [vmem:[%s4 + $0x4] sm:$0xf]
      %v476 = vld [vmem:[%s4 + $0x8] sm:$0xf]
      %v477 = vld [vmem:[%s4 + $0xc] sm:$0xf]
      %v478 = vld [vmem:[%s4 + $0x10] sm:$0xf]
      %v479 = vld [vmem:[%s4 + $0x14] sm:$0xf]
      %v480 = vld [vmem:[%s4 + $0x18] sm:$0xf]
      %v481 = vld [vmem:[%s4 + $0x1c] sm:$0xf]
      %v490 = vunpack.c.l.b16 %v474
      %v491 = vunpack.c.l.b16 %v475
      %v492 = vunpack.c.l.b16 %v476
      %v493 = vunpack.c.l.b16 %v477
      %v494 = vunpack.c.l.b16 %v478
      %v495 = vunpack.c.l.b16 %v479
      %v496 = vunpack.c.l.b16 %v480
      %v497 = vunpack.c.l.b16 %v481
      %v498 = vpack.c.b16 %v491, %v490
      %v499 = vpack.c.b16 %v493, %v492
      %v500 = vpack.c.b16 %v495, %v494
      %v501 = vpack.c.b16 %v497, %v496
      %vm506 = vcmask 523264
      %v508 = vsel %vm506, %v470, 0
      %v511 = vsel %vm506, %v471, 0
      %v514 = vsel %vm506, %v472, 0
      %v517 = vsel %vm506, %v473, 0
      %519 = vmatpush.bf16.msra.mxu0 0
      %520 = vmatpush.bf16.msra.mxu0 0
      %521 = vmatpush.bf16.msra.mxu0 0
      %522 = vmatpush.bf16.msra.mxu0 0
      %523 = vmatpush.bf16.msra.mxu0 %v501
      %524 = vmatpush.bf16.msra.mxu0 %v500
      %525 = vmatpush.bf16.msra.mxu0 %v499
      %526 = vmatpush.bf16.msra.mxu0 %v498
      %527 = vmatmul.bf16.gmra.mxu0 %v508
      %v528 = vpop.f32.mrf.mxu0
      %v529 = vadd.f32 0.0, %v528
      %v530 = vpop.f32.mrf.mxu0
      %v531 = vadd.f32 0.0, %v530
      %532 = vmatmul.bf16.gmra.mxu0 %v511
      %v533 = vpop.f32.mrf.mxu0
      %v534 = vadd.f32 0.0, %v533
      %v535 = vpop.f32.mrf.mxu0
      %v536 = vadd.f32 0.0, %v535
      %537 = vmatmul.bf16.gmra.mxu0 %v514
      %v538 = vpop.f32.mrf.mxu0
      %v539 = vadd.f32 0.0, %v538
      %v540 = vpop.f32.mrf.mxu0
      %v541 = vadd.f32 0.0, %v540
      %542 = vmatmul.bf16.gmra.mxu0 %v517
      %v543 = vpop.f32.mrf.mxu0
      %v544 = vadd.f32 0.0, %v543
      %v545 = vpop.f32.mrf.mxu0
      %v546 = vadd.f32 0.0, %v545
      %547 = vdwg.mxu0
      %v548 = vpack.c.bf16 %v529, %v529
      %v549 = vpack.c.bf16 %v531, %v531
      %v550 = vpack.c.bf16 %v534, %v534
      %v551 = vpack.c.bf16 %v536, %v536
      %v552 = vpack.c.bf16 %v539, %v539
      %v553 = vpack.c.bf16 %v541, %v541
      %v554 = vpack.c.bf16 %v544, %v544
      %v555 = vpack.c.bf16 %v546, %v546
      %556 = vst [vmem:[%s248] sm:$0xf] %v548
      %557 = vst [vmem:[%s248 + $0x4] sm:$0xf] %v549
      %558 = vst [vmem:[%s248 + $0x8] sm:$0xf] %v550
      %559 = vst [vmem:[%s248 + $0xc] sm:$0xf] %v551
      %560 = vst [vmem:[%s248 + $0x10] sm:$0xf] %v552
      %561 = vst [vmem:[%s248 + $0x14] sm:$0xf] %v553
      %562 = vst [vmem:[%s248 + $0x18] sm:$0xf] %v554
      %563 = vst [vmem:[%s248 + $0x1c] sm:$0xf] %v555
      %s564 = smul.u32 8, %s16
      %p565 = scmp.lt.s32.totalorder %s564, 15
      %s566 = scalar_select %p565, %s564, 15
      %s567 = smul.addr %s566, 4
      %s568 = scalar_lea.vmem %s5, %s567
      // Predicated region
      $region41: #{tun_bone_forward.7} parent=39 // pred_check
        %p569 = pneg %p149
      $region42: #{tun_bone_forward.7} parent=39 // pred_check_branch
        %571 = sbr.rel (%p569) target = $region44
      $region43: #{tun_bone_forward.7} parent=39 // pred_region
        %s572 = smul.u32 8, %s16
      $region44: #{tun_bone_forward.7} parent=39 // pred_fallthru
        _
    $region40: #{tun_bone_forward.7} parent=5 // pred_fallthru
      _
    %p573 = scmp.le.s32.totalorder 2, %s11
    // Predicated region
    $region45: #{tun_bone_forward.7} parent=5 // pred_check
      %p574 = pneg %p573
    $region46: #{tun_bone_forward.7} parent=5 // pred_check_branch
      %576 = sbr.rel (%p574) target = $region48
    $region47: #{tun_bone_forward.7} parent=5 // pred_region
      %s577 = ssub.s32 %s11, 2
      // Predicated region
      $region49: #{tun_bone_forward.7} parent=47 // pred_check
        %p578 = pneg %p155
      $region50: #{tun_bone_forward.7} parent=47 // pred_check_branch
        %580 = sbr.rel (%p578) target = $region52
      $region51: #{tun_bone_forward.7} parent=47 // pred_region
        %s581 = smul.u32 8, %s17
        %p582 = scmp.lt.s32.totalorder %s581, 15
        %s583 = scalar_select %p582, %s581, 15
        %s584 = smul.addr %s583, 4
        %s585 = scalar_lea.vmem %s5, %s584
      $region52: #{tun_bone_forward.7} parent=47 // pred_fallthru
        _
    $region48: #{tun_bone_forward.7} parent=5 // pred_fallthru
      _
  $region6: #{tun_bone_forward.7} parent=0 // loop_footer
    %s15 = sadd.s32 1, %s11
  $region7: #{tun_bone_forward.7} parent=0 // loop_footer_branch
    %10 = sbr.rel target = $region3
  $region8: #{tun_bone_forward.7} parent=0 // loop_exit
    _

// kernel: tun_bone_forward.5
$region0: #{tun_bone_forward.5}
  #allocation0 [shape = 'u32[]', space=smem, size = 0x4, offset = 0x4, fixed_abs, tag = 'smem constant byte address 0x4 - core index']
  #allocation1 [shape = 'u32[72,128]{1,0:T(1,128)}', space=vmem, size = 0x9000, scoped, tag = 'internal scratch']
  %s0 = inlined_call_operand.vmem [shape: f32[32,3], index: 0, kind: input, shape index: {}]
  %s1 = inlined_call_operand.vmem [shape: f32[3,32], index: 1, kind: input, shape index: {}]
  %s2 = inlined_call_operand.vmem [shape: bf16[32,64], index: 2, kind: input, shape index: {}]
  %s3 = inlined_call_operand.vmem [shape: bf16[64,128], index: 3, kind: input, shape index: {}]
  %s4 = inlined_call_operand.vmem [shape: bf16[32,128], index: 4, kind: output, shape index: {}]
  %s5 = sld [smem:[#allocation0]]
  $region49: #{tun_bone_forward.5} parent=0
    _
  %s7 = ssub.s32 1, %s5
  %s8 = scalar_select 0, %s7, %s5
  loop: start=0, step=1, limit=4
  $region2: #{tun_bone_forward.5} parent=0 // loop_pre_header
    _
  $region3: #{tun_bone_forward.5} parent=0 // loop_header
    %s10 = sphi 0, %s14
    %p11 = scmp.ge.s32.totalorder %s10, 4
    %s20 = sphi 0, %s22
    %s23 = sphi 0, %s20
    %s24 = sphi 0, %s23
    %s40 = sphi 0, %s24
    %s44 = sphi 0, %s44
    %s46 = sphi 0, %s44
    %s47 = sphi 0, %s46
    %s61 = sphi 0, %s47
    %s65 = sphi 0, %s65
    %s67 = sphi 0, %s65
    %s68 = sphi 0, %s67
    %s82 = sphi 0, %s68
    %s86 = sphi 0, %s86
    %s88 = sphi 0, %s86
    %s89 = sphi 0, %s88
    %s103 = sphi 0, %s89
    %s109 = sphi 0, %s111
    %s112 = sphi 0, %s109
    %s113 = sphi 0, %s112
    %s129 = sphi 0, %s113
  $region4: #{tun_bone_forward.5} parent=0 // loop_header_branch
    %13 = sbr.rel (%p11) target = $region8
  $region5: #{tun_bone_forward.5} parent=0 // loop_body
    %s15 = ssub.s32 %s10, 1
    %s16 = ssub.s32 %s10, 2
    %s17 = sadd.s32 %s10, 1
    %s18 = ssub.s32 %s10, %s17
    %p19 = scmp.eq.s32.totalorder %s18, 0
    %s21 = sadd.s32 %s20, 1
    %s22 = scalar_select %p19, %s20, %s21
    %p25 = pneg %p19
    %p26 = scmp.eq.s32.totalorder %s10, 1
    %p27 = por %p25, %p26
    %p28 = scmp.ne.s32.totalorder %s20, %s23
    %p29 = scmp.eq.s32.totalorder %s10, 0
    %p30 = por %p28, %p29
    %p31 = scmp.ne.s32.totalorder %s20, %s23
    %p32 = scmp.eq.s32.totalorder %s15, 1
    %p33 = por %p31, %p32
    %p34 = scmp.ne.s32.totalorder %s23, %s24
    %p35 = scmp.eq.s32.totalorder %s15, 0
    %p36 = por %p34, %p35
    %p37 = scmp.ne.s32.totalorder %s23, %s24
    %p38 = scmp.eq.s32.totalorder %s16, 1
    %p39 = por %p37, %p38
    %p41 = scmp.ne.s32.totalorder %s24, %s40
    %p42 = scmp.eq.s32.totalorder %s16, 0
    %p43 = por %p41, %p42
    %s45 = sadd.s32 %s44, 1
    %p48 = scmp.eq.s32.totalorder %s10, 1
    %p49 = scmp.ne.s32.totalorder %s44, %s46
    %p50 = scmp.eq.s32.totalorder %s10, 0
    %p51 = por %p49, %p50
    %p52 = scmp.ne.s32.totalorder %s44, %s46
    %p53 = scmp.eq.s32.totalorder %s15, 1
    %p54 = por %p52, %p53
    %p55 = scmp.ne.s32.totalorder %s46, %s47
    %p56 = scmp.eq.s32.totalorder %s15, 0
    %p57 = por %p55, %p56
    %p58 = scmp.ne.s32.totalorder %s46, %s47
    %p59 = scmp.eq.s32.totalorder %s16, 1
    %p60 = por %p58, %p59
    %p62 = scmp.ne.s32.totalorder %s47, %s61
    %p63 = scmp.eq.s32.totalorder %s16, 0
    %p64 = por %p62, %p63
    %s66 = sadd.s32 %s65, 1
    %p69 = scmp.eq.s32.totalorder %s10, 1
    %p70 = scmp.ne.s32.totalorder %s65, %s67
    %p71 = scmp.eq.s32.totalorder %s10, 0
    %p72 = por %p70, %p71
    %p73 = scmp.ne.s32.totalorder %s65, %s67
    %p74 = scmp.eq.s32.totalorder %s15, 1
    %p75 = por %p73, %p74
    %p76 = scmp.ne.s32.totalorder %s67, %s68
    %p77 = scmp.eq.s32.totalorder %s15, 0
    %p78 = por %p76, %p77
    %p79 = scmp.ne.s32.totalorder %s67, %s68
    %p80 = scmp.eq.s32.totalorder %s16, 1
    %p81 = por %p79, %p80
    %p83 = scmp.ne.s32.totalorder %s68, %s82
    %p84 = scmp.eq.s32.totalorder %s16, 0
    %p85 = por %p83, %p84
    %s87 = sadd.s32 %s86, 1
    %p90 = scmp.eq.s32.totalorder %s10, 1
    %p91 = scmp.ne.s32.totalorder %s86, %s88
    %p92 = scmp.eq.s32.totalorder %s10, 0
    %p93 = por %p91, %p92
    %p94 = scmp.ne.s32.totalorder %s86, %s88
    %p95 = scmp.eq.s32.totalorder %s15, 1
    %p96 = por %p94, %p95
    %p97 = scmp.ne.s32.totalorder %s88, %s89
    %p98 = scmp.eq.s32.totalorder %s15, 0
    %p99 = por %p97, %p98
    %p100 = scmp.ne.s32.totalorder %s88, %s89
    %p101 = scmp.eq.s32.totalorder %s16, 1
    %p102 = por %p100, %p101
    %p104 = scmp.ne.s32.totalorder %s89, %s103
    %p105 = scmp.eq.s32.totalorder %s16, 0
    %p106 = por %p104, %p105
    %s107 = ssub.s32 %s10, %s17
    %p108 = scmp.eq.s32.totalorder %s107, 0
    %s110 = sadd.s32 %s109, 1
    %s111 = scalar_select %p108, %s109, %s110
    %p114 = pneg %p108
    %p115 = scmp.eq.s32.totalorder %s10, 1
    %p116 = por %p114, %p115
    %p117 = scmp.ne.s32.totalorder %s109, %s112
    %p118 = scmp.eq.s32.totalorder %s10, 0
    %p119 = por %p117, %p118
    %p120 = scmp.ne.s32.totalorder %s109, %s112
    %p121 = scmp.eq.s32.totalorder %s15, 1
    %p122 = por %p120, %p121
    %p123 = scmp.ne.s32.totalorder %s112, %s113
    %p124 = scmp.eq.s32.totalorder %s15, 0
    %p125 = por %p123, %p124
    %p126 = scmp.ne.s32.totalorder %s112, %s113
    %p127 = scmp.eq.s32.totalorder %s16, 1
    %p128 = por %p126, %p127
    %p130 = scmp.ne.s32.totalorder %s113, %s129
    %p131 = scmp.eq.s32.totalorder %s16, 0
    %p132 = por %p130, %p131
    %p133 = scmp.le.s32.totalorder 1, %s10
    %p134 = scmp.lt.s32.totalorder %s10, 3
    %p135 = pnand %p133, %p134
    %p136 = pneg %p135
    // Predicated region
    $region9: #{tun_bone_forward.5} parent=5 // pred_check
      _
    $region10: #{tun_bone_forward.5} parent=5 // pred_check_branch
      %138 = sbr.rel (%p135) target = $region12
    $region11: #{tun_bone_forward.5} parent=5 // pred_region
      %s139 = ssub.s32 %s10, 1
      // Predicated region
      $region13: #{tun_bone_forward.5} parent=11 // pred_check
        %p140 = pneg %p57
      $region14: #{tun_bone_forward.5} parent=11 // pred_check_branch
        %142 = sbr.rel (%p140) target = $region16
      $region15: #{tun_bone_forward.5} parent=11 // pred_region
        _
      $region16: #{tun_bone_forward.5} parent=11 // pred_fallthru
        _
      // Predicated region
      $region17: #{tun_bone_forward.5} parent=11 // pred_check
        %p143 = pneg %p78
      $region18: #{tun_bone_forward.5} parent=11 // pred_check_branch
        %145 = sbr.rel (%p143) target = $region20
      $region19: #{tun_bone_forward.5} parent=11 // pred_region
        _
      $region20: #{tun_bone_forward.5} parent=11 // pred_fallthru
        _
      // Predicated region
      $region21: #{tun_bone_forward.5} parent=11 // pred_check
        %p146 = pneg %p99
      $region22: #{tun_bone_forward.5} parent=11 // pred_check_branch
        %148 = sbr.rel (%p146) target = $region24
      $region23: #{tun_bone_forward.5} parent=11 // pred_region
        _
      $region24: #{tun_bone_forward.5} parent=11 // pred_fallthru
        _
    $region12: #{tun_bone_forward.5} parent=5 // pred_fallthru
      _
    %p149 = scmp.lt.s32.totalorder %s10, 2
    // Predicated region
    $region25: #{tun_bone_forward.5} parent=5 // pred_check
      %p150 = pneg %p149
    $region26: #{tun_bone_forward.5} parent=5 // pred_check_branch
      %152 = sbr.rel (%p150) target = $region28
    $region27: #{tun_bone_forward.5} parent=5 // pred_region
      // Predicated region
      $region29: #{tun_bone_forward.5} parent=27 // pred_check
        %p153 = pneg %p30
      $region30: #{tun_bone_forward.5} parent=27 // pred_check_branch
        %155 = sbr.rel (%p153) target = $region32
      $region31: #{tun_bone_forward.5} parent=27 // pred_region
        %s156 = smul.u32 2, %s10
        %p157 = scmp.lt.s32.totalorder %s156, 3
        %s158 = scalar_select %p157, %s156, 3
        %s159 = smul.addr %s158, 8
        %s160 = scalar_lea.vmem %s0, %s159
        %s161 = smul.u32 2, %s10
      $region32: #{tun_bone_forward.5} parent=27 // pred_fallthru
        _
    $region28: #{tun_bone_forward.5} parent=5 // pred_fallthru
      _
    %p162 = scmp.le.s32.totalorder 1, %s10
    %p163 = scmp.lt.s32.totalorder %s10, 3
    %p164 = pnand %p162, %p163
    %p165 = pneg %p164
    // Predicated region
    $region33: #{tun_bone_forward.5} parent=5 // pred_check
      _
    $region34: #{tun_bone_forward.5} parent=5 // pred_check_branch
      %167 = sbr.rel (%p164) target = $region36
    $region35: #{tun_bone_forward.5} parent=5 // pred_region
      %s168 = ssub.s32 %s10, 1
      %s169 = smul.u32 2, %s15
      %p170 = scmp.lt.s32.totalorder %s169, 3
      %s171 = scalar_select %p170, %s169, 3
      %s172 = smul.addr %s171, 8
      %s173 = scalar_lea.vmem %s0, %s172
      %p174 = pneg %p36
      %p175 = pneg %p33
      %p176 = pneg %p57
      %p177 = pneg %p54
      %p178 = pneg %p78
      %p179 = pneg %p75
      %p180 = pneg %p99
      %p181 = pneg %p96
      %p182 = pneg %p125
      %p183 = pneg %p122
      %s184 = smul.u32 2, %s15
      %p185 = scmp.lt.s32.totalorder %s184, 3
      %s186 = scalar_select %p185, %s184, 3
      %s187 = smul.addr %s186, 4
      %s188 = scalar_lea.vmem %s4, %s187
      %s189 = smul.u32 2, %s15
      %p190 = scmp.lt.s32.totalorder %s189, 3
      %s191 = scalar_select %p190, %s189, 3
      %s192 = smul.addr %s191, 8
      %s193 = scalar_lea.vmem %s0, %s192
      %s194 = smul.u32 2, %s15
      %s195 = smul.u32 2, %s15
      %p196 = scmp.lt.s32.totalorder %s195, 3
      %s197 = scalar_select %p196, %s195, 3
      %s198 = smul.addr %s197, 4
      %s199 = scalar_lea.vmem %s4, %s198
      %s200 = smul.u32 2, %s15
      %v202 = vld [vmem:[%s193] sm:$0xff]
      %v203 = vld [vmem:[%s193 + $0x8] sm:$0xff]
      %v204 = vld [vmem:[%s1] sm:$0x7]
      %206 = vset.pattern.permute.xlu0 0
      %207 = vperm.xlu0 %206, %v202
      %v208 = vpop.permute.xlu0 %207
      %211 = vset.pattern.permute.xlu0 0
      %212 = vperm.xlu0 %211, %v203
      %v213 = vpop.permute.xlu0 %212
      %v215 = vperm.slane %v204, 0
      %v216 = vmul.f32 %v208, %v215
      %v217 = vmul.f32 %v213, %v215
      %218 = vset.pattern.permute.xlu0 1
      %219 = vperm.xlu0 %218, %v202
      %v220 = vpop.permute.xlu0 %219
      %222 = vset.pattern.permute.xlu0 1
      %223 = vperm.xlu0 %222, %v203
      %v224 = vpop.permute.xlu0 %223
      %v226 = vperm.slane %v204, 1
      %v227 = vmul.f32 %v220, %v226
      %v228 = vmul.f32 %v224, %v226
      %v229 = vadd.f32 %v216, %v227
      %v230 = vadd.f32 %v217, %v228
      %231 = vset.pattern.permute.xlu0 2
      %232 = vperm.xlu0 %231, %v202
      %v233 = vpop.permute.xlu0 %232
      %235 = vset.pattern.permute.xlu0 2
      %236 = vperm.xlu0 %235, %v203
      %v237 = vpop.permute.xlu0 %236
      %v239 = vperm.slane %v204, 2
      %v240 = vmul.f32 %v233, %v239
      %v241 = vmul.f32 %v237, %v239
      %v242 = vadd.f32 %v229, %v240
      %v243 = vadd.f32 %v230, %v241
      %v244 = vmax.f32 %v242, 0.0
      %v245 = vmax.f32 %v243, 0.0
      %v246 = vpack.c.bf16 %v245, %v244
      %v247 = vld [vmem:[%s2] sm:$0xf]
      %v248 = vld [vmem:[%s2 + $0x4] sm:$0xf]
      %v249 = vld [vmem:[%s2 + $0x8] sm:$0xf]
      %v250 = vld [vmem:[%s2 + $0xc] sm:$0xf]
      %v255 = vunpack.c.l.b16 %v247
      %v256 = vunpack.c.l.b16 %v248
      %v257 = vunpack.c.l.b16 %v249
      %v258 = vunpack.c.l.b16 %v250
      %v259 = vpack.c.b16 %v256, %v255
      %v260 = vpack.c.b16 %v258, %v257
      %vm263 = vcmask 261120
      %v265 = vsel %vm263, %v246, 0
      %267 = vmatpush.bf16.msra.mxu0 0
      %268 = vmatpush.bf16.msra.mxu0 0
      %269 = vmatpush.bf16.msra.mxu0 0
      %270 = vmatpush.bf16.msra.mxu0 0
      %271 = vmatpush.bf16.msra.mxu0 0
      %272 = vmatpush.bf16.msra.mxu0 0
      %273 = vmatpush.bf16.msra.mxu0 %v260
      %274 = vmatpush.bf16.msra.mxu0 %v259
      %275 = vmatmul.bf16.gmra.mxu0 %v265
      %v276 = vpop.f32.mrf.mxu0
      %v277 = vadd.f32 0.0, %v276
      %v278 = vpop.f32.mrf.mxu0
      %v279 = vadd.f32 0.0, %v278
      %280 = vdwg.mxu0
      %v281 = vmax.f32 %v277, 0.0
      %v282 = vmax.f32 %v279, 0.0
      %v283 = vpack.c.bf16 %v282, %v281
      %v284 = vld [vmem:[%s3] sm:$0xf]
      %v285 = vld [vmem:[%s3 + $0x4] sm:$0xf]
      %v286 = vld [vmem:[%s3 + $0x8] sm:$0xf]
      %v287 = vld [vmem:[%s3 + $0xc] sm:$0xf]
      %v288 = vld [vmem:[%s3 + $0x10] sm:$0xf]
      %v289 = vld [vmem:[%s3 + $0x14] sm:$0xf]
      %v290 = vld [vmem:[%s3 + $0x18] sm:$0xf]
      %v291 = vld [vmem:[%s3 + $0x1c] sm:$0xf]
      %v300 = vunpack.c.l.b16 %v284
      %v301 = vunpack.c.l.b16 %v285
      %v302 = vunpack.c.l.b16 %v286
      %v303 = vunpack.c.l.b16 %v287
      %v304 = vunpack.c.l.b16 %v288
      %v305 = vunpack.c.l.b16 %v289
      %v306 = vunpack.c.l.b16 %v290
      %v307 = vunpack.c.l.b16 %v291
      %v308 = vpack.c.b16 %v301, %v300
      %v309 = vpack.c.b16 %v303, %v302
      %v310 = vpack.c.b16 %v305, %v304
      %v311 = vpack.c.b16 %v307, %v306
      %vm316 = vcmask 523264
      %v318 = vsel %vm316, %v283, 0
      %320 = vmatpush.bf16.msra.mxu0 0
      %321 = vmatpush.bf16.msra.mxu0 0
      %322 = vmatpush.bf16.msra.mxu0 0
      %323 = vmatpush.bf16.msra.mxu0 0
      %324 = vmatpush.bf16.msra.mxu0 %v311
      %325 = vmatpush.bf16.msra.mxu0 %v310
      %326 = vmatpush.bf16.msra.mxu0 %v309
      %327 = vmatpush.bf16.msra.mxu0 %v308
      %328 = vmatmul.bf16.gmra.mxu0 %v318
      %v329 = vpop.f32.mrf.mxu0
      %v330 = vadd.f32 0.0, %v329
      %v331 = vpop.f32.mrf.mxu0
      %v332 = vadd.f32 0.0, %v331
      %333 = vdwg.mxu0
      %v334 = vpack.c.bf16 %v330, %v330
      %v335 = vpack.c.bf16 %v332, %v332
      %336 = vst [vmem:[%s199] sm:$0xf] %v334
      %337 = vst [vmem:[%s199 + $0x4] sm:$0xf] %v335
      %s338 = smul.u32 2, %s15
      %p339 = scmp.lt.s32.totalorder %s338, 3
      %s340 = scalar_select %p339, %s338, 3
      %s341 = smul.addr %s340, 4
      %s342 = scalar_lea.vmem %s4, %s341
      // Predicated region
      $region37: #{tun_bone_forward.5} parent=35 // pred_check
        %p343 = pneg %p122
      $region38: #{tun_bone_forward.5} parent=35 // pred_check_branch
        %345 = sbr.rel (%p343) target = $region40
      $region39: #{tun_bone_forward.5} parent=35 // pred_region
        %s346 = smul.u32 2, %s15
      $region40: #{tun_bone_forward.5} parent=35 // pred_fallthru
        _
    $region36: #{tun_bone_forward.5} parent=5 // pred_fallthru
      _
    %p347 = scmp.le.s32.totalorder 2, %s10
    // Predicated region
    $region41: #{tun_bone_forward.5} parent=5 // pred_check
      %p348 = pneg %p347
    $region42: #{tun_bone_forward.5} parent=5 // pred_check_branch
      %350 = sbr.rel (%p348) target = $region44
    $region43: #{tun_bone_forward.5} parent=5 // pred_region
      %s351 = ssub.s32 %s10, 2
      // Predicated region
      $region45: #{tun_bone_forward.5} parent=43 // pred_check
        %p352 = pneg %p128
      $region46: #{tun_bone_forward.5} parent=43 // pred_check_branch
        %354 = sbr.rel (%p352) target = $region48
      $region47: #{tun_bone_forward.5} parent=43 // pred_region
        %s355 = smul.u32 2, %s16
        %p356 = scmp.lt.s32.totalorder %s355, 3
        %s357 = scalar_select %p356, %s355, 3
        %s358 = smul.addr %s357, 4
        %s359 = scalar_lea.vmem %s4, %s358
      $region48: #{tun_bone_forward.5} parent=43 // pred_fallthru
        _
    $region44: #{tun_bone_forward.5} parent=5 // pred_fallthru
      _
  $region6: #{tun_bone_forward.5} parent=0 // loop_footer
    %s14 = sadd.s32 1, %s10
  $region7: #{tun_bone_forward.5} parent=0 // loop_footer_branch
    %9 = sbr.rel target = $region3
  $region8: #{tun_bone_forward.5} parent=0 // loop_exit
    _

</llo_original>
